<compile_context>
chip_gen: v7x
topology: tpu7x:2x2x1
jax: 0.10.0
libtpu: 0.0.40
codegen_flags: <defaults>
</compile_context>

<pallas_src>
import jax
import jax.numpy as jnp
from jax import lax
from jax.experimental import pallas as pl
from jax.experimental.pallas import tpu as pltpu


# --------------------------- fused attention kernel ------------------------ #
def _fused_attention_kernel(xq_ref, x_ref, wq_ref, wk_ref, wv_ref, wp_ref,
                            bp_ref, out_ref, attn_ref):
    """One grid step processes BB batch elements; everything stays in VMEM."""
    BB, Nq, Cq = xq_ref.shape
    _, Nk, Ck = x_ref.shape
    H, _, hd = wq_ref.shape
    D = wp_ref.shape[2]

    # Fold the local batch into the matmul M dimension (bigger MXU tiles).
    # Leading-dim-only reshape: last dim unchanged -> no lane movement.
    xq = xq_ref[...].reshape(BB * Nq, Cq)      # bf16
    xk = x_ref[...].reshape(BB * Nk, Ck)       # bf16

    acc = None                                 # (BB*Nq, D) f32 accumulator
    for h in range(H):                         # static unroll over heads
        # Per-head projections with lane-offset-0 weight tiles (no lane slicing).
        # Softmax scale is pre-folded into wq_ref, so no per-tile multiply.
        q_h = jnp.dot(xq, wq_ref[h],
                      preferred_element_type=jnp.float32).astype(jnp.bfloat16)
        k_h = jnp.dot(xk, wk_ref[h],
                      preferred_element_type=jnp.float32).astype(jnp.bfloat16)
        v_h = jnp.dot(xk, wv_ref[h],
                      preferred_element_type=jnp.float32).astype(jnp.bfloat16)

        ctx_rows = []
        for bl in range(BB):                   # static unroll over local batch
            # Sublane-aligned row slices (Nq, Nk multiples of 8).
            qs = q_h[bl * Nq:(bl + 1) * Nq]
            ks = k_h[bl * Nk:(bl + 1) * Nk]
            vs = v_h[bl * Nk:(bl + 1) * Nk]

            # QK^T: contract last axes directly (no explicit transpose).
            s = lax.dot_general(qs, ks, (((1,), (1,)), ((), ())),
                                preferred_element_type=jnp.float32)  # (Nq, Nk)

            # Exact f32 softmax (attn is part of the module contract).
            m = jnp.max(s, axis=-1, keepdims=True)
            e = jnp.exp(s - m)
            p = e / jnp.sum(e, axis=-1, keepdims=True)
            attn_ref[bl, h] = p.astype(attn_ref.dtype)

            ctx_rows.append(jnp.dot(p.astype(jnp.bfloat16), vs,
                                    preferred_element_type=jnp.float32))

        # Sublane-axis concat only (not lane packing); skipped when BB == 1.
        ctx_h = ctx_rows[0] if BB == 1 else jnp.concatenate(ctx_rows, axis=0)

        # Output projection accumulated over heads: replaces the lane-packing
        # concatenate with MXU work (wp_ref[h] is an (hd, D) sublane tile).
        contrib = jnp.dot(ctx_h.astype(jnp.bfloat16), wp_ref[h],
                          preferred_element_type=jnp.float32)        # (BB*Nq, D)
        acc = contrib if acc is None else acc + contrib

    out = acc + bp_ref[...]                    # bias broadcast (1, D)
    out_ref[...] = out.reshape(BB, Nq, D).astype(out_ref.dtype)


# ------------------------------ parameters --------------------------------- #
class AttentionParams:
    """Deterministic synthetic parameters matching the PyTorch module shapes.

    Canonical f32 weights (w_q, w_kv, w_proj, b_proj) are stored exactly as an
    nn.Linear would hold them (transposed to (in, out)).  Kernel-side copies are
    derived from them:
      * the softmax scale is folded into the q-projection copy ONLY
        (softmax((x Wq) k^T * s) == softmax((x (Wq*s)) k^T), exact),
      * weights are pre-split per head and cast to bf16 for MXU-native matmuls.
    The canonical f32 weights themselves are never modified.
    """

    def __init__(self, key, in_dim_k, in_dim_q, out_dim, num_heads=8,
                 qkv_bias=False, qk_scale=None):
        assert not qkv_bias, "module is exercised with its default qkv_bias=False"
        assert out_dim % num_heads == 0
        self.num_heads = num_heads
        self.out_dim = out_dim
        head_dim = out_dim // num_heads
        self.scale = qk_scale or head_dim ** (-0.5)

        k1, k2, k3, k4 = jax.random.split(key, 4)
        s = 0.05
        # Stored as (in, out) -- transpose of nn.Linear.weight.
        self.w_q = jax.random.normal(k1, (in_dim_q, out_dim), jnp.float32) * s
        self.w_kv = jax.random.normal(k2, (in_dim_k, 2 * out_dim), jnp.float32) * s
        self.w_proj = jax.random.normal(k3, (out_dim, out_dim), jnp.float32) * s
        self.b_proj = jax.random.normal(k4, (out_dim,), jnp.float32) * s

        H, hd, D = num_heads, head_dim, out_dim
        # Kernel-side per-head, bf16, scale-folded copies (lane-offset-0 tiles).
        wq_scaled = self.w_q * self.scale                               # fold scale
        self.wq_heads = jnp.transpose(
            wq_scaled.reshape(in_dim_q, H, hd), (1, 0, 2)).astype(jnp.bfloat16)
        w_k = self.w_kv[:, :D]
        w_v = self.w_kv[:, D:]
        self.wk_heads = jnp.transpose(
            w_k.reshape(in_dim_k, H, hd), (1, 0, 2)).astype(jnp.bfloat16)
        self.wv_heads = jnp.transpose(
            w_v.reshape(in_dim_k, H, hd), (1, 0, 2)).astype(jnp.bfloat16)
        self.wp_heads = self.w_proj.reshape(H, hd, D).astype(jnp.bfloat16)
        self.b_proj_2d = self.b_proj.reshape(1, D)                      # f32


# ------------------------------ forward wrapper ----------------------------- #
def attention_forward(params, x, x_q, *, grid_steps=None):
    """x: (B, Nk, Ck), x_q: (B, Nq, Cq) -> (out (B, Nq, D) f32, attn (B, H, Nq, Nk) f32)."""
    B, Nk, Ck = x.shape
    Bq, Nq, Cq = x_q.shape
    assert B == Bq
    H = params.num_heads
    D = params.out_dim
    hd = D // H

    # Grid policy: at most 2 serial steps (single-TC v5e/v6e pay minimal per-step
    # overhead) and >= 2 parallel steps whenever B is even so both v7x
    # TensorCores get work.  Remaining batch elements are folded into each
    # step's matmul M dimension.
    if grid_steps is None:
        grid_steps = 2 if (B >= 2 and B % 2 == 0) else 1
    assert B % grid_steps == 0, "grid_steps must divide the batch"
    BB = B // grid_steps

    # bf16 activations: MXU-native operands and half the input DMA bytes.
    xq_bf = x_q.astype(jnp.bfloat16)
    x_bf = x.astype(jnp.bfloat16)

    # Advisory cost hint so XLA schedules neighbouring ops around this call.
    flops = 2 * B * (Nq * Cq * D          # q projection
                     + 2 * Nk * Ck * D    # k and v projections
                     + 2 * H * Nq * Nk * hd   # scores + ctx
                     + Nq * D * D)        # output projection
    bytes_accessed = (xq_bf.size * 2 + x_bf.size * 2
                      + params.wq_heads.size * 2 + params.wk_heads.size * 2
                      + params.wv_heads.size * 2 + params.wp_heads.size * 2
                      + params.b_proj_2d.size * 4
                      + B * Nq * D * 4 + B * H * Nq * Nk * 4)
    cost = pl.CostEstimate(flops=flops, transcendentals=B * H * Nq * Nk,
                           bytes_accessed=bytes_accessed)

    out, attn = pl.pallas_call(
        _fused_attention_kernel,
        out_shape=(
            jax.ShapeDtypeStruct((B, Nq, D), jnp.float32),
            jax.ShapeDtypeStruct((B, H, Nq, Nk), jnp.float32),
        ),
        grid=(grid_steps,),
        in_specs=[
            pl.BlockSpec((BB, Nq, Cq), lambda g: (g, 0, 0)),       # x_q (bf16)
            pl.BlockSpec((BB, Nk, Ck), lambda g: (g, 0, 0)),       # x   (bf16)
            pl.BlockSpec((H, Cq, hd), lambda g: (0, 0, 0)),        # w_q  per-head, scale folded
            pl.BlockSpec((H, Ck, hd), lambda g: (0, 0, 0)),        # w_k  per-head
            pl.BlockSpec((H, Ck, hd), lambda g: (0, 0, 0)),        # w_v  per-head
            pl.BlockSpec((H, hd, D), lambda g: (0, 0, 0)),         # w_proj per-head
            pl.BlockSpec((1, D), lambda g: (0, 0)),                # b_proj
        ],
        out_specs=(
            pl.BlockSpec((BB, Nq, D), lambda g: (g, 0, 0)),        # out
            pl.BlockSpec((BB, H, Nq, Nk), lambda g: (g, 0, 0, 0)),  # attn
        ),
        compiler_params=pltpu.CompilerParams(
            dimension_semantics=("parallel",)),   # split across TCs on v7x
        cost_estimate=cost,
    )(xq_bf, x_bf, params.wq_heads, params.wk_heads, params.wv_heads,
      params.wp_heads, params.b_proj_2d)

    # attn_drop / proj_drop have p=0.0 -> identity (eval semantics).
    return out, attn


# ----------------------------------- main ----------------------------------- #
if __name__ == "__main__":
    key = jax.random.PRNGKey(0)
    k_params, k_x, k_xq = jax.random.split(key, 3)

    # Small shapes consistent with the module.
    B, Nk, Nq = 2, 8, 8
    in_dim_k, in_dim_q, out_dim, num_heads = 32, 32, 32, 4   # head_dim = 8

    params = AttentionParams(k_params, in_dim_k, in_dim_q, out_dim, num_heads)
    x = jax.random.normal(k_x, (B, Nk, in_dim_k), jnp.float32)
    x_q = jax.random.normal(k_xq, (B, Nq, in_dim_q), jnp.float32)

    out, attn = attention_forward(params, x, x_q)
    jax.block_until_ready((out, attn))

    # Pure-JAX f32 reference (mirrors the PyTorch forward exactly).
    hd = out_dim // num_heads
    q_r = (x_q @ params.w_q).reshape(B, Nq, num_heads, hd).transpose(0, 2, 1, 3)
    kv_r = (x @ params.w_kv).reshape(B, Nk, 2, num_heads, hd).transpose(2, 0, 3, 1, 4)
    k_r, v_r = kv_r[0], kv_r[1]
    s_r = jnp.einsum("bhqd,bhkd->bhqk", q_r, k_r) * params.scale
    a_r = jax.nn.softmax(s_r, axis=-1)
    o_r = jnp.einsum("bhqk,bhkd->bhqd", a_r, v_r).transpose(0, 2, 1, 3).reshape(B, Nq, out_dim)
    o_r = o_r @ params.w_proj + params.b_proj

    # Softmax is exact in the kernel; the only approximation vs. the f32
    # reference is bf16 rounding of the MXU matmul operands.
    assert jnp.allclose(attn, a_r, atol=2e-2, rtol=2e-2), \
        f"attn mismatch: {jnp.max(jnp.abs(attn - a_r))}"
    assert jnp.allclose(out, o_r, atol=2e-2, rtol=2e-2), \
        f"out mismatch: {jnp.max(jnp.abs(out - o_r))}"
    print("KERNEL_OK")
</pallas_src>

<mosaic_0001>
module attributes {stable_mosaic.version = 11 : i64} {
  func.func @_fused_attention_kernel(%arg0: i32, %arg1: memref<1x8x32xbf16, #tpu.memory_space<vmem>>, %arg2: memref<1x8x32xbf16, #tpu.memory_space<vmem>>, %arg3: memref<4x32x8xbf16, #tpu.memory_space<vmem>>, %arg4: memref<4x32x8xbf16, #tpu.memory_space<vmem>>, %arg5: memref<4x32x8xbf16, #tpu.memory_space<vmem>>, %arg6: memref<4x8x32xbf16, #tpu.memory_space<vmem>>, %arg7: memref<1x32xf32, #tpu.memory_space<vmem>>, %arg8: memref<1x8x32xf32, #tpu.memory_space<vmem>>, %arg9: memref<1x4x8x8xf32, #tpu.memory_space<vmem>>) attributes {dimension_semantics = [#tpu.dimension_semantics<parallel>], iteration_bounds = array<i64: 2>, scalar_prefetch = 0 : i64, scratch_operands = 0 : i64, tpu.core_type = #tpu.core_type<tc>, window_params = [{transform_indices = @transform_0, window_bounds = array<i64: 1, 8, 32>}, {transform_indices = @transform_1, window_bounds = array<i64: 1, 8, 32>}, {pipeline_mode = #tpu.pipeline_mode<synchronous>, transform_indices = @transform_2, window_bounds = array<i64: 4, 32, 8>}, {pipeline_mode = #tpu.pipeline_mode<synchronous>, transform_indices = @transform_3, window_bounds = array<i64: 4, 32, 8>}, {pipeline_mode = #tpu.pipeline_mode<synchronous>, transform_indices = @transform_4, window_bounds = array<i64: 4, 32, 8>}, {pipeline_mode = #tpu.pipeline_mode<synchronous>, transform_indices = @transform_5, window_bounds = array<i64: 4, 8, 32>}, {pipeline_mode = #tpu.pipeline_mode<synchronous>, transform_indices = @transform_6, window_bounds = array<i64: 1, 32>}, {transform_indices = @transform_7, window_bounds = array<i64: 1, 8, 32>}, {transform_indices = @transform_8, window_bounds = array<i64: 1, 4, 8, 8>}]} {
    %c0 = arith.constant 0 : index
    %c0_0 = arith.constant 0 : index
    %c0_1 = arith.constant 0 : index
    %0 = vector.load %arg1[%c0, %c0_0, %c0_1] : memref<1x8x32xbf16, #tpu.memory_space<vmem>>, vector<1x8x32xbf16>
    %1 = vector.shape_cast %0 : vector<1x8x32xbf16> to vector<8x32xbf16>
    %c0_2 = arith.constant 0 : index
    %c0_3 = arith.constant 0 : index
    %c0_4 = arith.constant 0 : index
    %2 = vector.load %arg2[%c0_2, %c0_3, %c0_4] : memref<1x8x32xbf16, #tpu.memory_space<vmem>>, vector<1x8x32xbf16>
    %3 = vector.shape_cast %2 : vector<1x8x32xbf16> to vector<8x32xbf16>
    %c0_5 = arith.constant 0 : index
    %c0_6 = arith.constant 0 : index
    %c0_7 = arith.constant 0 : index
    %4 = vector.load %arg3[%c0_5, %c0_6, %c0_7] : memref<4x32x8xbf16, #tpu.memory_space<vmem>>, vector<1x32x8xbf16>
    %5 = vector.shape_cast %4 : vector<1x32x8xbf16> to vector<32x8xbf16>
    %cst = arith.constant dense<0.000000e+00> : vector<8x8xf32>
    %6 = tpu.matmul %1, %5, %cst {dimension_numbers = #tpu.dot_dimension_numbers<[1], [0], [0], [1], [0, 0, 1, 1], [], []>} : vector<8x32xbf16>, vector<32x8xbf16>, vector<8x8xf32> -> vector<8x8xf32>
    %7 = arith.truncf %6 : vector<8x8xf32> to vector<8x8xbf16>
    %c0_8 = arith.constant 0 : index
    %c0_9 = arith.constant 0 : index
    %c0_10 = arith.constant 0 : index
    %8 = vector.load %arg4[%c0_8, %c0_9, %c0_10] : memref<4x32x8xbf16, #tpu.memory_space<vmem>>, vector<1x32x8xbf16>
    %9 = vector.shape_cast %8 : vector<1x32x8xbf16> to vector<32x8xbf16>
    %cst_11 = arith.constant dense<0.000000e+00> : vector<8x8xf32>
    %10 = tpu.matmul %3, %9, %cst_11 {dimension_numbers = #tpu.dot_dimension_numbers<[1], [0], [0], [1], [0, 0, 1, 1], [], []>} : vector<8x32xbf16>, vector<32x8xbf16>, vector<8x8xf32> -> vector<8x8xf32>
    %11 = arith.truncf %10 : vector<8x8xf32> to vector<8x8xbf16>
    %c0_12 = arith.constant 0 : index
    %c0_13 = arith.constant 0 : index
    %c0_14 = arith.constant 0 : index
    %12 = vector.load %arg5[%c0_12, %c0_13, %c0_14] : memref<4x32x8xbf16, #tpu.memory_space<vmem>>, vector<1x32x8xbf16>
    %13 = vector.shape_cast %12 : vector<1x32x8xbf16> to vector<32x8xbf16>
    %cst_15 = arith.constant dense<0.000000e+00> : vector<8x8xf32>
    %14 = tpu.matmul %3, %13, %cst_15 {dimension_numbers = #tpu.dot_dimension_numbers<[1], [0], [0], [1], [0, 0, 1, 1], [], []>} : vector<8x32xbf16>, vector<32x8xbf16>, vector<8x8xf32> -> vector<8x8xf32>
    %15 = arith.truncf %14 : vector<8x8xf32> to vector<8x8xbf16>
    %cst_16 = arith.constant dense<0.000000e+00> : vector<8x8xf32>
    %16 = tpu.matmul %7, %11, %cst_16 {dimension_numbers = #tpu.dot_dimension_numbers<[1], [1], [0], [0], [0, 0, 1, 0], [], []>} : vector<8x8xbf16>, vector<8x8xbf16>, vector<8x8xf32> -> vector<8x8xf32>
    %cst_17 = arith.constant dense<0xFF800000> : vector<8xf32>
    %17 = vector.multi_reduction <maximumf>, %16, %cst_17 [1] : vector<8x8xf32> to vector<8xf32>
    %18 = vector.shape_cast %17 : vector<8xf32> to vector<8x1xf32>
    %19 = vector.broadcast %18 : vector<8x1xf32> to vector<8x8xf32>
    %20 = arith.subf %16, %19 : vector<8x8xf32>
    %21 = math.exp %20 : vector<8x8xf32>
    %cst_18 = arith.constant dense<0.000000e+00> : vector<8xf32>
    %22 = vector.multi_reduction <add>, %21, %cst_18 [1] : vector<8x8xf32> to vector<8xf32>
    %23 = vector.shape_cast %22 : vector<8xf32> to vector<8x1xf32>
    %24 = vector.broadcast %23 : vector<8x1xf32> to vector<8x8xf32>
    %25 = arith.divf %21, %24 : vector<8x8xf32>
    %c0_19 = arith.constant 0 : index
    %c0_20 = arith.constant 0 : index
    %c0_21 = arith.constant 0 : index
    %c0_22 = arith.constant 0 : index
    %26 = vector.load %arg9[%c0_19, %c0_20, %c0_21, %c0_22] : memref<1x4x8x8xf32, #tpu.memory_space<vmem>>, vector<1x1x8x8xf32>
    %27 = vector.shape_cast %26 : vector<1x1x8x8xf32> to vector<8x8xf32>
    %28 = vector.shape_cast %25 : vector<8x8xf32> to vector<1x1x8x8xf32>
    tpu.vector_store %arg9[%c0_19, %c0_20, %c0_21, %c0_22], %28 {strides = array<i32>} : memref<1x4x8x8xf32, #tpu.memory_space<vmem>>, vector<1x1x8x8xf32>,
    %29 = arith.truncf %25 : vector<8x8xf32> to vector<8x8xbf16>
    %cst_23 = arith.constant dense<0.000000e+00> : vector<8x8xf32>
    %30 = tpu.matmul %29, %15, %cst_23 {dimension_numbers = #tpu.dot_dimension_numbers<[1], [0], [0], [1], [0, 0, 1, 1], [], []>} : vector<8x8xbf16>, vector<8x8xbf16>, vector<8x8xf32> -> vector<8x8xf32>
    %31 = arith.truncf %30 : vector<8x8xf32> to vector<8x8xbf16>
    %c0_24 = arith.constant 0 : index
    %c0_25 = arith.constant 0 : index
    %c0_26 = arith.constant 0 : index
    %32 = vector.load %arg6[%c0_24, %c0_25, %c0_26] : memref<4x8x32xbf16, #tpu.memory_space<vmem>>, vector<1x8x32xbf16>
    %33 = vector.shape_cast %32 : vector<1x8x32xbf16> to vector<8x32xbf16>
    %cst_27 = arith.constant dense<0.000000e+00> : vector<8x32xf32>
    %34 = tpu.matmul %31, %33, %cst_27 {dimension_numbers = #tpu.dot_dimension_numbers<[1], [0], [0], [1], [0, 0, 1, 1], [], []>} : vector<8x8xbf16>, vector<8x32xbf16>, vector<8x32xf32> -> vector<8x32xf32>
    %c1 = arith.constant 1 : index
    %c0_28 = arith.constant 0 : index
    %c0_29 = arith.constant 0 : index
    %35 = vector.load %arg3[%c1, %c0_28, %c0_29] : memref<4x32x8xbf16, #tpu.memory_space<vmem>>, vector<1x32x8xbf16>
    %36 = vector.shape_cast %35 : vector<1x32x8xbf16> to vector<32x8xbf16>
    %cst_30 = arith.constant dense<0.000000e+00> : vector<8x8xf32>
    %37 = tpu.matmul %1, %36, %cst_30 {dimension_numbers = #tpu.dot_dimension_numbers<[1], [0], [0], [1], [0, 0, 1, 1], [], []>} : vector<8x32xbf16>, vector<32x8xbf16>, vector<8x8xf32> -> vector<8x8xf32>
    %38 = arith.truncf %37 : vector<8x8xf32> to vector<8x8xbf16>
    %c1_31 = arith.constant 1 : index
    %c0_32 = arith.constant 0 : index
    %c0_33 = arith.constant 0 : index
    %39 = vector.load %arg4[%c1_31, %c0_32, %c0_33] : memref<4x32x8xbf16, #tpu.memory_space<vmem>>, vector<1x32x8xbf16>
    %40 = vector.shape_cast %39 : vector<1x32x8xbf16> to vector<32x8xbf16>
    %cst_34 = arith.constant dense<0.000000e+00> : vector<8x8xf32>
    %41 = tpu.matmul %3, %40, %cst_34 {dimension_numbers = #tpu.dot_dimension_numbers<[1], [0], [0], [1], [0, 0, 1, 1], [], []>} : vector<8x32xbf16>, vector<32x8xbf16>, vector<8x8xf32> -> vector<8x8xf32>
    %42 = arith.truncf %41 : vector<8x8xf32> to vector<8x8xbf16>
    %c1_35 = arith.constant 1 : index
    %c0_36 = arith.constant 0 : index
    %c0_37 = arith.constant 0 : index
    %43 = vector.load %arg5[%c1_35, %c0_36, %c0_37] : memref<4x32x8xbf16, #tpu.memory_space<vmem>>, vector<1x32x8xbf16>
    %44 = vector.shape_cast %43 : vector<1x32x8xbf16> to vector<32x8xbf16>
    %cst_38 = arith.constant dense<0.000000e+00> : vector<8x8xf32>
    %45 = tpu.matmul %3, %44, %cst_38 {dimension_numbers = #tpu.dot_dimension_numbers<[1], [0], [0], [1], [0, 0, 1, 1], [], []>} : vector<8x32xbf16>, vector<32x8xbf16>, vector<8x8xf32> -> vector<8x8xf32>
    %46 = arith.truncf %45 : vector<8x8xf32> to vector<8x8xbf16>
    %cst_39 = arith.constant dense<0.000000e+00> : vector<8x8xf32>
    %47 = tpu.matmul %38, %42, %cst_39 {dimension_numbers = #tpu.dot_dimension_numbers<[1], [1], [0], [0], [0, 0, 1, 0], [], []>} : vector<8x8xbf16>, vector<8x8xbf16>, vector<8x8xf32> -> vector<8x8xf32>
    %cst_40 = arith.constant dense<0xFF800000> : vector<8xf32>
    %48 = vector.multi_reduction <maximumf>, %47, %cst_40 [1] : vector<8x8xf32> to vector<8xf32>
    %49 = vector.shape_cast %48 : vector<8xf32> to vector<8x1xf32>
    %50 = vector.broadcast %49 : vector<8x1xf32> to vector<8x8xf32>
    %51 = arith.subf %47, %50 : vector<8x8xf32>
    %52 = math.exp %51 : vector<8x8xf32>
    %cst_41 = arith.constant dense<0.000000e+00> : vector<8xf32>
    %53 = vector.multi_reduction <add>, %52, %cst_41 [1] : vector<8x8xf32> to vector<8xf32>
    %54 = vector.shape_cast %53 : vector<8xf32> to vector<8x1xf32>
    %55 = vector.broadcast %54 : vector<8x1xf32> to vector<8x8xf32>
    %56 = arith.divf %52, %55 : vector<8x8xf32>
    %c0_42 = arith.constant 0 : index
    %c1_43 = arith.constant 1 : index
    %c0_44 = arith.constant 0 : index
    %c0_45 = arith.constant 0 : index
    %57 = vector.load %arg9[%c0_42, %c1_43, %c0_44, %c0_45] : memref<1x4x8x8xf32, #tpu.memory_space<vmem>>, vector<1x1x8x8xf32>
    %58 = vector.shape_cast %57 : vector<1x1x8x8xf32> to vector<8x8xf32>
    %59 = vector.shape_cast %56 : vector<8x8xf32> to vector<1x1x8x8xf32>
    tpu.vector_store %arg9[%c0_42, %c1_43, %c0_44, %c0_45], %59 {strides = array<i32>} : memref<1x4x8x8xf32, #tpu.memory_space<vmem>>, vector<1x1x8x8xf32>,
    %60 = arith.truncf %56 : vector<8x8xf32> to vector<8x8xbf16>
    %cst_46 = arith.constant dense<0.000000e+00> : vector<8x8xf32>
    %61 = tpu.matmul %60, %46, %cst_46 {dimension_numbers = #tpu.dot_dimension_numbers<[1], [0], [0], [1], [0, 0, 1, 1], [], []>} : vector<8x8xbf16>, vector<8x8xbf16>, vector<8x8xf32> -> vector<8x8xf32>
    %62 = arith.truncf %61 : vector<8x8xf32> to vector<8x8xbf16>
    %c1_47 = arith.constant 1 : index
    %c0_48 = arith.constant 0 : index
    %c0_49 = arith.constant 0 : index
    %63 = vector.load %arg6[%c1_47, %c0_48, %c0_49] : memref<4x8x32xbf16, #tpu.memory_space<vmem>>, vector<1x8x32xbf16>
    %64 = vector.shape_cast %63 : vector<1x8x32xbf16> to vector<8x32xbf16>
    %cst_50 = arith.constant dense<0.000000e+00> : vector<8x32xf32>
    %65 = tpu.matmul %62, %64, %cst_50 {dimension_numbers = #tpu.dot_dimension_numbers<[1], [0], [0], [1], [0, 0, 1, 1], [], []>} : vector<8x8xbf16>, vector<8x32xbf16>, vector<8x32xf32> -> vector<8x32xf32>
    %66 = arith.addf %34, %65 : vector<8x32xf32>
    %c2 = arith.constant 2 : index
    %c0_51 = arith.constant 0 : index
    %c0_52 = arith.constant 0 : index
    %67 = vector.load %arg3[%c2, %c0_51, %c0_52] : memref<4x32x8xbf16, #tpu.memory_space<vmem>>, vector<1x32x8xbf16>
    %68 = vector.shape_cast %67 : vector<1x32x8xbf16> to vector<32x8xbf16>
    %cst_53 = arith.constant dense<0.000000e+00> : vector<8x8xf32>
    %69 = tpu.matmul %1, %68, %cst_53 {dimension_numbers = #tpu.dot_dimension_numbers<[1], [0], [0], [1], [0, 0, 1, 1], [], []>} : vector<8x32xbf16>, vector<32x8xbf16>, vector<8x8xf32> -> vector<8x8xf32>
    %70 = arith.truncf %69 : vector<8x8xf32> to vector<8x8xbf16>
    %c2_54 = arith.constant 2 : index
    %c0_55 = arith.constant 0 : index
    %c0_56 = arith.constant 0 : index
    %71 = vector.load %arg4[%c2_54, %c0_55, %c0_56] : memref<4x32x8xbf16, #tpu.memory_space<vmem>>, vector<1x32x8xbf16>
    %72 = vector.shape_cast %71 : vector<1x32x8xbf16> to vector<32x8xbf16>
    %cst_57 = arith.constant dense<0.000000e+00> : vector<8x8xf32>
    %73 = tpu.matmul %3, %72, %cst_57 {dimension_numbers = #tpu.dot_dimension_numbers<[1], [0], [0], [1], [0, 0, 1, 1], [], []>} : vector<8x32xbf16>, vector<32x8xbf16>, vector<8x8xf32> -> vector<8x8xf32>
    %74 = arith.truncf %73 : vector<8x8xf32> to vector<8x8xbf16>
    %c2_58 = arith.constant 2 : index
    %c0_59 = arith.constant 0 : index
    %c0_60 = arith.constant 0 : index
    %75 = vector.load %arg5[%c2_58, %c0_59, %c0_60] : memref<4x32x8xbf16, #tpu.memory_space<vmem>>, vector<1x32x8xbf16>
    %76 = vector.shape_cast %75 : vector<1x32x8xbf16> to vector<32x8xbf16>
    %cst_61 = arith.constant dense<0.000000e+00> : vector<8x8xf32>
    %77 = tpu.matmul %3, %76, %cst_61 {dimension_numbers = #tpu.dot_dimension_numbers<[1], [0], [0], [1], [0, 0, 1, 1], [], []>} : vector<8x32xbf16>, vector<32x8xbf16>, vector<8x8xf32> -> vector<8x8xf32>
    %78 = arith.truncf %77 : vector<8x8xf32> to vector<8x8xbf16>
    %cst_62 = arith.constant dense<0.000000e+00> : vector<8x8xf32>
    %79 = tpu.matmul %70, %74, %cst_62 {dimension_numbers = #tpu.dot_dimension_numbers<[1], [1], [0], [0], [0, 0, 1, 0], [], []>} : vector<8x8xbf16>, vector<8x8xbf16>, vector<8x8xf32> -> vector<8x8xf32>
    %cst_63 = arith.constant dense<0xFF800000> : vector<8xf32>
    %80 = vector.multi_reduction <maximumf>, %79, %cst_63 [1] : vector<8x8xf32> to vector<8xf32>
    %81 = vector.shape_cast %80 : vector<8xf32> to vector<8x1xf32>
    %82 = vector.broadcast %81 : vector<8x1xf32> to vector<8x8xf32>
    %83 = arith.subf %79, %82 : vector<8x8xf32>
    %84 = math.exp %83 : vector<8x8xf32>
    %cst_64 = arith.constant dense<0.000000e+00> : vector<8xf32>
    %85 = vector.multi_reduction <add>, %84, %cst_64 [1] : vector<8x8xf32> to vector<8xf32>
    %86 = vector.shape_cast %85 : vector<8xf32> to vector<8x1xf32>
    %87 = vector.broadcast %86 : vector<8x1xf32> to vector<8x8xf32>
    %88 = arith.divf %84, %87 : vector<8x8xf32>
    %c0_65 = arith.constant 0 : index
    %c2_66 = arith.constant 2 : index
    %c0_67 = arith.constant 0 : index
    %c0_68 = arith.constant 0 : index
    %89 = vector.load %arg9[%c0_65, %c2_66, %c0_67, %c0_68] : memref<1x4x8x8xf32, #tpu.memory_space<vmem>>, vector<1x1x8x8xf32>
    %90 = vector.shape_cast %89 : vector<1x1x8x8xf32> to vector<8x8xf32>
    %91 = vector.shape_cast %88 : vector<8x8xf32> to vector<1x1x8x8xf32>
    tpu.vector_store %arg9[%c0_65, %c2_66, %c0_67, %c0_68], %91 {strides = array<i32>} : memref<1x4x8x8xf32, #tpu.memory_space<vmem>>, vector<1x1x8x8xf32>,
    %92 = arith.truncf %88 : vector<8x8xf32> to vector<8x8xbf16>
    %cst_69 = arith.constant dense<0.000000e+00> : vector<8x8xf32>
    %93 = tpu.matmul %92, %78, %cst_69 {dimension_numbers = #tpu.dot_dimension_numbers<[1], [0], [0], [1], [0, 0, 1, 1], [], []>} : vector<8x8xbf16>, vector<8x8xbf16>, vector<8x8xf32> -> vector<8x8xf32>
    %94 = arith.truncf %93 : vector<8x8xf32> to vector<8x8xbf16>
    %c2_70 = arith.constant 2 : index
    %c0_71 = arith.constant 0 : index
    %c0_72 = arith.constant 0 : index
    %95 = vector.load %arg6[%c2_70, %c0_71, %c0_72] : memref<4x8x32xbf16, #tpu.memory_space<vmem>>, vector<1x8x32xbf16>
    %96 = vector.shape_cast %95 : vector<1x8x32xbf16> to vector<8x32xbf16>
    %cst_73 = arith.constant dense<0.000000e+00> : vector<8x32xf32>
    %97 = tpu.matmul %94, %96, %cst_73 {dimension_numbers = #tpu.dot_dimension_numbers<[1], [0], [0], [1], [0, 0, 1, 1], [], []>} : vector<8x8xbf16>, vector<8x32xbf16>, vector<8x32xf32> -> vector<8x32xf32>
    %98 = arith.addf %66, %97 : vector<8x32xf32>
    %c3 = arith.constant 3 : index
    %c0_74 = arith.constant 0 : index
    %c0_75 = arith.constant 0 : index
    %99 = vector.load %arg3[%c3, %c0_74, %c0_75] : memref<4x32x8xbf16, #tpu.memory_space<vmem>>, vector<1x32x8xbf16>
    %100 = vector.shape_cast %99 : vector<1x32x8xbf16> to vector<32x8xbf16>
    %cst_76 = arith.constant dense<0.000000e+00> : vector<8x8xf32>
    %101 = tpu.matmul %1, %100, %cst_76 {dimension_numbers = #tpu.dot_dimension_numbers<[1], [0], [0], [1], [0, 0, 1, 1], [], []>} : vector<8x32xbf16>, vector<32x8xbf16>, vector<8x8xf32> -> vector<8x8xf32>
    %102 = arith.truncf %101 : vector<8x8xf32> to vector<8x8xbf16>
    %c3_77 = arith.constant 3 : index
    %c0_78 = arith.constant 0 : index
    %c0_79 = arith.constant 0 : index
    %103 = vector.load %arg4[%c3_77, %c0_78, %c0_79] : memref<4x32x8xbf16, #tpu.memory_space<vmem>>, vector<1x32x8xbf16>
    %104 = vector.shape_cast %103 : vector<1x32x8xbf16> to vector<32x8xbf16>
    %cst_80 = arith.constant dense<0.000000e+00> : vector<8x8xf32>
    %105 = tpu.matmul %3, %104, %cst_80 {dimension_numbers = #tpu.dot_dimension_numbers<[1], [0], [0], [1], [0, 0, 1, 1], [], []>} : vector<8x32xbf16>, vector<32x8xbf16>, vector<8x8xf32> -> vector<8x8xf32>
    %106 = arith.truncf %105 : vector<8x8xf32> to vector<8x8xbf16>
    %c3_81 = arith.constant 3 : index
    %c0_82 = arith.constant 0 : index
    %c0_83 = arith.constant 0 : index
    %107 = vector.load %arg5[%c3_81, %c0_82, %c0_83] : memref<4x32x8xbf16, #tpu.memory_space<vmem>>, vector<1x32x8xbf16>
    %108 = vector.shape_cast %107 : vector<1x32x8xbf16> to vector<32x8xbf16>
    %cst_84 = arith.constant dense<0.000000e+00> : vector<8x8xf32>
    %109 = tpu.matmul %3, %108, %cst_84 {dimension_numbers = #tpu.dot_dimension_numbers<[1], [0], [0], [1], [0, 0, 1, 1], [], []>} : vector<8x32xbf16>, vector<32x8xbf16>, vector<8x8xf32> -> vector<8x8xf32>
    %110 = arith.truncf %109 : vector<8x8xf32> to vector<8x8xbf16>
    %cst_85 = arith.constant dense<0.000000e+00> : vector<8x8xf32>
    %111 = tpu.matmul %102, %106, %cst_85 {dimension_numbers = #tpu.dot_dimension_numbers<[1], [1], [0], [0], [0, 0, 1, 0], [], []>} : vector<8x8xbf16>, vector<8x8xbf16>, vector<8x8xf32> -> vector<8x8xf32>
    %cst_86 = arith.constant dense<0xFF800000> : vector<8xf32>
    %112 = vector.multi_reduction <maximumf>, %111, %cst_86 [1] : vector<8x8xf32> to vector<8xf32>
    %113 = vector.shape_cast %112 : vector<8xf32> to vector<8x1xf32>
    %114 = vector.broadcast %113 : vector<8x1xf32> to vector<8x8xf32>
    %115 = arith.subf %111, %114 : vector<8x8xf32>
    %116 = math.exp %115 : vector<8x8xf32>
    %cst_87 = arith.constant dense<0.000000e+00> : vector<8xf32>
    %117 = vector.multi_reduction <add>, %116, %cst_87 [1] : vector<8x8xf32> to vector<8xf32>
    %118 = vector.shape_cast %117 : vector<8xf32> to vector<8x1xf32>
    %119 = vector.broadcast %118 : vector<8x1xf32> to vector<8x8xf32>
    %120 = arith.divf %116, %119 : vector<8x8xf32>
    %c0_88 = arith.constant 0 : index
    %c3_89 = arith.constant 3 : index
    %c0_90 = arith.constant 0 : index
    %c0_91 = arith.constant 0 : index
    %121 = vector.load %arg9[%c0_88, %c3_89, %c0_90, %c0_91] : memref<1x4x8x8xf32, #tpu.memory_space<vmem>>, vector<1x1x8x8xf32>
    %122 = vector.shape_cast %121 : vector<1x1x8x8xf32> to vector<8x8xf32>
    %123 = vector.shape_cast %120 : vector<8x8xf32> to vector<1x1x8x8xf32>
    tpu.vector_store %arg9[%c0_88, %c3_89, %c0_90, %c0_91], %123 {strides = array<i32>} : memref<1x4x8x8xf32, #tpu.memory_space<vmem>>, vector<1x1x8x8xf32>,
    %124 = arith.truncf %120 : vector<8x8xf32> to vector<8x8xbf16>
    %cst_92 = arith.constant dense<0.000000e+00> : vector<8x8xf32>
    %125 = tpu.matmul %124, %110, %cst_92 {dimension_numbers = #tpu.dot_dimension_numbers<[1], [0], [0], [1], [0, 0, 1, 1], [], []>} : vector<8x8xbf16>, vector<8x8xbf16>, vector<8x8xf32> -> vector<8x8xf32>
    %126 = arith.truncf %125 : vector<8x8xf32> to vector<8x8xbf16>
    %c3_93 = arith.constant 3 : index
    %c0_94 = arith.constant 0 : index
    %c0_95 = arith.constant 0 : index
    %127 = vector.load %arg6[%c3_93, %c0_94, %c0_95] : memref<4x8x32xbf16, #tpu.memory_space<vmem>>, vector<1x8x32xbf16>
    %128 = vector.shape_cast %127 : vector<1x8x32xbf16> to vector<8x32xbf16>
    %cst_96 = arith.constant dense<0.000000e+00> : vector<8x32xf32>
    %129 = tpu.matmul %126, %128, %cst_96 {dimension_numbers = #tpu.dot_dimension_numbers<[1], [0], [0], [1], [0, 0, 1, 1], [], []>} : vector<8x8xbf16>, vector<8x32xbf16>, vector<8x32xf32> -> vector<8x32xf32>
    %130 = arith.addf %98, %129 : vector<8x32xf32>
    %c0_97 = arith.constant 0 : index
    %c0_98 = arith.constant 0 : index
    %131 = vector.load %arg7[%c0_97, %c0_98] : memref<1x32xf32, #tpu.memory_space<vmem>>, vector<1x32xf32>
    %132 = vector.broadcast %131 : vector<1x32xf32> to vector<8x32xf32>
    %133 = arith.addf %130, %132 : vector<8x32xf32>
    %134 = vector.shape_cast %133 : vector<8x32xf32> to vector<1x8x32xf32>
    %c0_99 = arith.constant 0 : index
    %c0_100 = arith.constant 0 : index
    %c0_101 = arith.constant 0 : index
    %135 = vector.load %arg8[%c0_99, %c0_100, %c0_101] : memref<1x8x32xf32, #tpu.memory_space<vmem>>, vector<1x8x32xf32>
    tpu.vector_store %arg8[%c0_99, %c0_100, %c0_101], %134 {strides = array<i32>} : memref<1x8x32xf32, #tpu.memory_space<vmem>>, vector<1x8x32xf32>,
    return
  }
  func.func @transform_0(%arg0: i32) -> (i32, i32, i32) {
    %c0_i32 = arith.constant 0 : i32
    %c0_i32_0 = arith.constant 0 : i32
    %c0_i32_1 = arith.constant 0 : i32
    return %arg0, %c0_i32, %c0_i32_0 : i32, i32, i32
  }
  func.func @transform_1(%arg0: i32) -> (i32, i32, i32) {
    %c0_i32 = arith.constant 0 : i32
    %c0_i32_0 = arith.constant 0 : i32
    %c0_i32_1 = arith.constant 0 : i32
    return %arg0, %c0_i32, %c0_i32_0 : i32, i32, i32
  }
  func.func @transform_2(%arg0: i32) -> (i32, i32, i32) {
    %c0_i32 = arith.constant 0 : i32
    %c0_i32_0 = arith.constant 0 : i32
    %c0_i32_1 = arith.constant 0 : i32
    %c0_i32_2 = arith.constant 0 : i32
    return %c0_i32, %c0_i32_0, %c0_i32_1 : i32, i32, i32
  }
  func.func @transform_3(%arg0: i32) -> (i32, i32, i32) {
    %c0_i32 = arith.constant 0 : i32
    %c0_i32_0 = arith.constant 0 : i32
    %c0_i32_1 = arith.constant 0 : i32
    %c0_i32_2 = arith.constant 0 : i32
    return %c0_i32, %c0_i32_0, %c0_i32_1 : i32, i32, i32
  }
  func.func @transform_4(%arg0: i32) -> (i32, i32, i32) {
    %c0_i32 = arith.constant 0 : i32
    %c0_i32_0 = arith.constant 0 : i32
    %c0_i32_1 = arith.constant 0 : i32
    %c0_i32_2 = arith.constant 0 : i32
    return %c0_i32, %c0_i32_0, %c0_i32_1 : i32, i32, i32
  }
  func.func @transform_5(%arg0: i32) -> (i32, i32, i32) {
    %c0_i32 = arith.constant 0 : i32
    %c0_i32_0 = arith.constant 0 : i32
    %c0_i32_1 = arith.constant 0 : i32
    %c0_i32_2 = arith.constant 0 : i32
    return %c0_i32, %c0_i32_0, %c0_i32_1 : i32, i32, i32
  }
  func.func @transform_6(%arg0: i32) -> (i32, i32) {
    %c0_i32 = arith.constant 0 : i32
    %c0_i32_0 = arith.constant 0 : i32
    %c0_i32_1 = arith.constant 0 : i32
    return %c0_i32, %c0_i32_0 : i32, i32
  }
  func.func @transform_7(%arg0: i32) -> (i32, i32, i32) {
    %c0_i32 = arith.constant 0 : i32
    %c0_i32_0 = arith.constant 0 : i32
    %c0_i32_1 = arith.constant 0 : i32
    return %arg0, %c0_i32, %c0_i32_0 : i32, i32, i32
  }
  func.func @transform_8(%arg0: i32) -> (i32, i32, i32, i32) {
    %c0_i32 = arith.constant 0 : i32
    %c0_i32_0 = arith.constant 0 : i32
    %c0_i32_1 = arith.constant 0 : i32
    %c0_i32_2 = arith.constant 0 : i32
    return %arg0, %c0_i32, %c0_i32_0, %c0_i32_1 : i32, i32, i32, i32
  }
}

</mosaic_0001>

<llo_original>
// kernel: tpu_custom_call.1
$region0: #{tpu_custom_call.1}
  #allocation0 [shape = 'u32[]', space=smem, size = 0x4, offset = 0x4, fixed_abs, tag = 'smem constant byte address 0x4 - core index']
  #allocation1 [shape = 'u32[144,128]{1,0:T(1,128)}', space=vmem, size = 0x12000, scoped, tag = 'internal scratch']
  %s0 = inlined_call_operand.vmem [shape: bf16[2,8,32], index: 0, kind: input, shape index: {}]
  %s1 = inlined_call_operand.vmem [shape: bf16[2,8,32], index: 1, kind: input, shape index: {}]
  %s2 = inlined_call_operand.vmem [shape: bf16[4,32,8], index: 2, kind: input, shape index: {}]
  %s3 = inlined_call_operand.vmem [shape: bf16[4,32,8], index: 3, kind: input, shape index: {}]
  %s4 = inlined_call_operand.vmem [shape: bf16[4,32,8], index: 4, kind: input, shape index: {}]
  %s5 = inlined_call_operand.vmem [shape: bf16[4,8,32], index: 5, kind: input, shape index: {}]
  %s6 = inlined_call_operand.vmem [shape: f32[1,32], index: 6, kind: input, shape index: {}]
  %s7 = inlined_call_operand.hbm [shape: f32[2,8,32], index: 7, kind: output, shape index: {0}]
  %s8 = inlined_call_operand.hbm [shape: f32[2,4,8,8], index: 8, kind: output, shape index: {1}]
  %9 = xla_tuple %s7, %s8
  %s10 = sld [smem:[#allocation0]]
  $region69: #{tpu_custom_call.1} parent=0
    _
  %s12 = ssub.s32 1, %s10
  %s13 = scalar_select 0, %s12, %s10
  $region1: #{tpu_custom_call.1} parent=0
    #allocation2 [shape = 'u8[8192]{0}', space=vmem, size = 0x2000, scoped, tag = 'output window, operand 0']
    #allocation3 [shape = 's32[2]{0}', space=sflag, size = 0x8, scoped, tag = 'scoped memory for tpu_custom_call.1']
    #allocation4 [shape = 'u8[32768]{0}', space=vmem, size = 0x8000, scoped, tag = 'output window, operand 1']
    #allocation5 [shape = 's32[2]{0}', space=sflag, size = 0x8, scoped, tag = 'scoped memory for tpu_custom_call.1']
    %14 = vsyncpa [#allocation3], 0
    %s15 = scalar_lea.sflag [#allocation3], 1
    %16 = vsyncpa %s15, 0
    %17 = vsyncpa [#allocation5], 0
    %s18 = scalar_lea.sflag [#allocation5], 1
    %19 = vsyncpa %s18, 0
    loop: start=0, step=1, limit=4
    $region2: #{tpu_custom_call.1} parent=1 // loop_pre_header
      _
    $region3: #{tpu_custom_call.1} parent=1 // loop_header
      %s21 = sphi 0, %s25
      %p22 = scmp.ge.s32.totalorder %s21, 4
      %s31 = sphi 0, %s33
      %s34 = sphi 0, %s31
      %s35 = sphi 0, %s34
      %s51 = sphi 0, %s35
      %s57 = sphi 0, %s59
      %s60 = sphi 0, %s57
      %s61 = sphi 0, %s60
      %s77 = sphi 0, %s61
      %s81 = sphi 0, %s81
      %s83 = sphi 0, %s81
      %s84 = sphi 0, %s83
      %s98 = sphi 0, %s84
      %s102 = sphi 0, %s102
      %s104 = sphi 0, %s102
      %s105 = sphi 0, %s104
      %s119 = sphi 0, %s105
      %s123 = sphi 0, %s123
      %s125 = sphi 0, %s123
      %s126 = sphi 0, %s125
      %s140 = sphi 0, %s126
      %s144 = sphi 0, %s144
      %s146 = sphi 0, %s144
      %s147 = sphi 0, %s146
      %s161 = sphi 0, %s147
      %s165 = sphi 0, %s165
      %s167 = sphi 0, %s165
      %s168 = sphi 0, %s167
      %s182 = sphi 0, %s168
      %s188 = sphi 0, %s190
      %s191 = sphi 0, %s188
      %s192 = sphi 0, %s191
      %s208 = sphi 0, %s192
      %s214 = sphi 0, %s216
      %s217 = sphi 0, %s214
      %s218 = sphi 0, %s217
      %s234 = sphi 0, %s218
    $region4: #{tpu_custom_call.1} parent=1 // loop_header_branch
      %24 = sbr.rel (%p22) target = $region8
    $region5: #{tpu_custom_call.1} parent=1 // loop_body
      %s26 = ssub.s32 %s21, 1
      %s27 = ssub.s32 %s21, 2
      %s28 = sadd.s32 %s21, 1
      %s29 = ssub.s32 %s21, %s28
      %p30 = scmp.eq.s32.totalorder %s29, 0
      %s32 = sadd.s32 %s31, 1
      %s33 = scalar_select %p30, %s31, %s32
      %p36 = pneg %p30
      %p37 = scmp.eq.s32.totalorder %s21, 1
      %p38 = por %p36, %p37
      %p39 = scmp.ne.s32.totalorder %s31, %s34
      %p40 = scmp.eq.s32.totalorder %s21, 0
      %p41 = por %p39, %p40
      %p42 = scmp.ne.s32.totalorder %s31, %s34
      %p43 = scmp.eq.s32.totalorder %s26, 1
      %p44 = por %p42, %p43
      %p45 = scmp.ne.s32.totalorder %s34, %s35
      %p46 = scmp.eq.s32.totalorder %s26, 0
      %p47 = por %p45, %p46
      %p48 = scmp.ne.s32.totalorder %s34, %s35
      %p49 = scmp.eq.s32.totalorder %s27, 1
      %p50 = por %p48, %p49
      %p52 = scmp.ne.s32.totalorder %s35, %s51
      %p53 = scmp.eq.s32.totalorder %s27, 0
      %p54 = por %p52, %p53
      %s55 = ssub.s32 %s21, %s28
      %p56 = scmp.eq.s32.totalorder %s55, 0
      %s58 = sadd.s32 %s57, 1
      %s59 = scalar_select %p56, %s57, %s58
      %p62 = pneg %p56
      %p63 = scmp.eq.s32.totalorder %s21, 1
      %p64 = por %p62, %p63
      %p65 = scmp.ne.s32.totalorder %s57, %s60
      %p66 = scmp.eq.s32.totalorder %s21, 0
      %p67 = por %p65, %p66
      %p68 = scmp.ne.s32.totalorder %s57, %s60
      %p69 = scmp.eq.s32.totalorder %s26, 1
      %p70 = por %p68, %p69
      %p71 = scmp.ne.s32.totalorder %s60, %s61
      %p72 = scmp.eq.s32.totalorder %s26, 0
      %p73 = por %p71, %p72
      %p74 = scmp.ne.s32.totalorder %s60, %s61
      %p75 = scmp.eq.s32.totalorder %s27, 1
      %p76 = por %p74, %p75
      %p78 = scmp.ne.s32.totalorder %s61, %s77
      %p79 = scmp.eq.s32.totalorder %s27, 0
      %p80 = por %p78, %p79
      %s82 = sadd.s32 %s81, 1
      %p85 = scmp.eq.s32.totalorder %s21, 1
      %p86 = scmp.ne.s32.totalorder %s81, %s83
      %p87 = scmp.eq.s32.totalorder %s21, 0
      %p88 = por %p86, %p87
      %p89 = scmp.ne.s32.totalorder %s81, %s83
      %p90 = scmp.eq.s32.totalorder %s26, 1
      %p91 = por %p89, %p90
      %p92 = scmp.ne.s32.totalorder %s83, %s84
      %p93 = scmp.eq.s32.totalorder %s26, 0
      %p94 = por %p92, %p93
      %p95 = scmp.ne.s32.totalorder %s83, %s84
      %p96 = scmp.eq.s32.totalorder %s27, 1
      %p97 = por %p95, %p96
      %p99 = scmp.ne.s32.totalorder %s84, %s98
      %p100 = scmp.eq.s32.totalorder %s27, 0
      %p101 = por %p99, %p100
      %s103 = sadd.s32 %s102, 1
      %p106 = scmp.eq.s32.totalorder %s21, 1
      %p107 = scmp.ne.s32.totalorder %s102, %s104
      %p108 = scmp.eq.s32.totalorder %s21, 0
      %p109 = por %p107, %p108
      %p110 = scmp.ne.s32.totalorder %s102, %s104
      %p111 = scmp.eq.s32.totalorder %s26, 1
      %p112 = por %p110, %p111
      %p113 = scmp.ne.s32.totalorder %s104, %s105
      %p114 = scmp.eq.s32.totalorder %s26, 0
      %p115 = por %p113, %p114
      %p116 = scmp.ne.s32.totalorder %s104, %s105
      %p117 = scmp.eq.s32.totalorder %s27, 1
      %p118 = por %p116, %p117
      %p120 = scmp.ne.s32.totalorder %s105, %s119
      %p121 = scmp.eq.s32.totalorder %s27, 0
      %p122 = por %p120, %p121
      %s124 = sadd.s32 %s123, 1
      %p127 = scmp.eq.s32.totalorder %s21, 1
      %p128 = scmp.ne.s32.totalorder %s123, %s125
      %p129 = scmp.eq.s32.totalorder %s21, 0
      %p130 = por %p128, %p129
      %p131 = scmp.ne.s32.totalorder %s123, %s125
      %p132 = scmp.eq.s32.totalorder %s26, 1
      %p133 = por %p131, %p132
      %p134 = scmp.ne.s32.totalorder %s125, %s126
      %p135 = scmp.eq.s32.totalorder %s26, 0
      %p136 = por %p134, %p135
      %p137 = scmp.ne.s32.totalorder %s125, %s126
      %p138 = scmp.eq.s32.totalorder %s27, 1
      %p139 = por %p137, %p138
      %p141 = scmp.ne.s32.totalorder %s126, %s140
      %p142 = scmp.eq.s32.totalorder %s27, 0
      %p143 = por %p141, %p142
      %s145 = sadd.s32 %s144, 1
      %p148 = scmp.eq.s32.totalorder %s21, 1
      %p149 = scmp.ne.s32.totalorder %s144, %s146
      %p150 = scmp.eq.s32.totalorder %s21, 0
      %p151 = por %p149, %p150
      %p152 = scmp.ne.s32.totalorder %s144, %s146
      %p153 = scmp.eq.s32.totalorder %s26, 1
      %p154 = por %p152, %p153
      %p155 = scmp.ne.s32.totalorder %s146, %s147
      %p156 = scmp.eq.s32.totalorder %s26, 0
      %p157 = por %p155, %p156
      %p158 = scmp.ne.s32.totalorder %s146, %s147
      %p159 = scmp.eq.s32.totalorder %s27, 1
      %p160 = por %p158, %p159
      %p162 = scmp.ne.s32.totalorder %s147, %s161
      %p163 = scmp.eq.s32.totalorder %s27, 0
      %p164 = por %p162, %p163
      %s166 = sadd.s32 %s165, 1
      %p169 = scmp.eq.s32.totalorder %s21, 1
      %p170 = scmp.ne.s32.totalorder %s165, %s167
      %p171 = scmp.eq.s32.totalorder %s21, 0
      %p172 = por %p170, %p171
      %p173 = scmp.ne.s32.totalorder %s165, %s167
      %p174 = scmp.eq.s32.totalorder %s26, 1
      %p175 = por %p173, %p174
      %p176 = scmp.ne.s32.totalorder %s167, %s168
      %p177 = scmp.eq.s32.totalorder %s26, 0
      %p178 = por %p176, %p177
      %p179 = scmp.ne.s32.totalorder %s167, %s168
      %p180 = scmp.eq.s32.totalorder %s27, 1
      %p181 = por %p179, %p180
      %p183 = scmp.ne.s32.totalorder %s168, %s182
      %p184 = scmp.eq.s32.totalorder %s27, 0
      %p185 = por %p183, %p184
      %s186 = ssub.s32 %s21, %s28
      %p187 = scmp.eq.s32.totalorder %s186, 0
      %s189 = sadd.s32 %s188, 1
      %s190 = scalar_select %p187, %s188, %s189
      %p193 = pneg %p187
      %p194 = scmp.eq.s32.totalorder %s21, 1
      %p195 = por %p193, %p194
      %p196 = scmp.ne.s32.totalorder %s188, %s191
      %p197 = scmp.eq.s32.totalorder %s21, 0
      %p198 = por %p196, %p197
      %p199 = scmp.ne.s32.totalorder %s188, %s191
      %p200 = scmp.eq.s32.totalorder %s26, 1
      %p201 = por %p199, %p200
      %p202 = scmp.ne.s32.totalorder %s191, %s192
      %p203 = scmp.eq.s32.totalorder %s26, 0
      %p204 = por %p202, %p203
      %p205 = scmp.ne.s32.totalorder %s191, %s192
      %p206 = scmp.eq.s32.totalorder %s27, 1
      %p207 = por %p205, %p206
      %p209 = scmp.ne.s32.totalorder %s192, %s208
      %p210 = scmp.eq.s32.totalorder %s27, 0
      %p211 = por %p209, %p210
      %s212 = ssub.s32 %s21, %s28
      %p213 = scmp.eq.s32.totalorder %s212, 0
      %s215 = sadd.s32 %s214, 1
      %s216 = scalar_select %p213, %s214, %s215
      %p219 = pneg %p213
      %p220 = scmp.eq.s32.totalorder %s21, 1
      %p221 = por %p219, %p220
      %p222 = scmp.ne.s32.totalorder %s214, %s217
      %p223 = scmp.eq.s32.totalorder %s21, 0
      %p224 = por %p222, %p223
      %p225 = scmp.ne.s32.totalorder %s214, %s217
      %p226 = scmp.eq.s32.totalorder %s26, 1
      %p227 = por %p225, %p226
      %p228 = scmp.ne.s32.totalorder %s217, %s218
      %p229 = scmp.eq.s32.totalorder %s26, 0
      %p230 = por %p228, %p229
      %p231 = scmp.ne.s32.totalorder %s217, %s218
      %p232 = scmp.eq.s32.totalorder %s27, 1
      %p233 = por %p231, %p232
      %p235 = scmp.ne.s32.totalorder %s218, %s234
      %p236 = scmp.eq.s32.totalorder %s27, 0
      %p237 = por %p235, %p236
      %p238 = scmp.le.s32.totalorder 1, %s21
      %p239 = scmp.lt.s32.totalorder %s21, 3
      %p240 = pnand %p238, %p239
      %p241 = pneg %p240
      // Predicated region
      $region9: #{tpu_custom_call.1} parent=5 // pred_check
        _
      $region10: #{tpu_custom_call.1} parent=5 // pred_check_branch
        %243 = sbr.rel (%p240) target = $region12
      $region11: #{tpu_custom_call.1} parent=5 // pred_region
        %s244 = ssub.s32 %s21, 1
        // Predicated region
        $region13: #{tpu_custom_call.1} parent=11 // pred_check
          %p245 = pneg %p94
        $region14: #{tpu_custom_call.1} parent=11 // pred_check_branch
          %247 = sbr.rel (%p245) target = $region16
        $region15: #{tpu_custom_call.1} parent=11 // pred_region
          _
        $region16: #{tpu_custom_call.1} parent=11 // pred_fallthru
          _
        // Predicated region
        $region17: #{tpu_custom_call.1} parent=11 // pred_check
          %p248 = pneg %p115
        $region18: #{tpu_custom_call.1} parent=11 // pred_check_branch
          %250 = sbr.rel (%p248) target = $region20
        $region19: #{tpu_custom_call.1} parent=11 // pred_region
          _
        $region20: #{tpu_custom_call.1} parent=11 // pred_fallthru
          _
        // Predicated region
        $region21: #{tpu_custom_call.1} parent=11 // pred_check
          %p251 = pneg %p136
        $region22: #{tpu_custom_call.1} parent=11 // pred_check_branch
          %253 = sbr.rel (%p251) target = $region24
        $region23: #{tpu_custom_call.1} parent=11 // pred_region
          _
        $region24: #{tpu_custom_call.1} parent=11 // pred_fallthru
          _
        // Predicated region
        $region25: #{tpu_custom_call.1} parent=11 // pred_check
          %p254 = pneg %p157
        $region26: #{tpu_custom_call.1} parent=11 // pred_check_branch
          %256 = sbr.rel (%p254) target = $region28
        $region27: #{tpu_custom_call.1} parent=11 // pred_region
          _
        $region28: #{tpu_custom_call.1} parent=11 // pred_fallthru
          _
        // Predicated region
        $region29: #{tpu_custom_call.1} parent=11 // pred_check
          %p257 = pneg %p178
        $region30: #{tpu_custom_call.1} parent=11 // pred_check_branch
          %259 = sbr.rel (%p257) target = $region32
        $region31: #{tpu_custom_call.1} parent=11 // pred_region
          _
        $region32: #{tpu_custom_call.1} parent=11 // pred_fallthru
          _
      $region12: #{tpu_custom_call.1} parent=5 // pred_fallthru
        _
      %p260 = scmp.lt.s32.totalorder %s21, 2
      // Predicated region
      $region33: #{tpu_custom_call.1} parent=5 // pred_check
        %p261 = pneg %p260
      $region34: #{tpu_custom_call.1} parent=5 // pred_check_branch
        %263 = sbr.rel (%p261) target = $region36
      $region35: #{tpu_custom_call.1} parent=5 // pred_region
        // Predicated region
        $region37: #{tpu_custom_call.1} parent=35 // pred_check
          %p264 = pneg %p41
        $region38: #{tpu_custom_call.1} parent=35 // pred_check_branch
          %266 = sbr.rel (%p264) target = $region40
        $region39: #{tpu_custom_call.1} parent=35 // pred_region
          %p267 = scmp.lt.s32.totalorder %s21, 1
          %s268 = scalar_select %p267, %s21, 1
          %s269 = smul.addr %s268, 4
          %s270 = scalar_lea.vmem %s0, %s269
        $region40: #{tpu_custom_call.1} parent=35 // pred_fallthru
          _
        // Predicated region
        $region41: #{tpu_custom_call.1} parent=35 // pred_check
          %p271 = pneg %p67
        $region42: #{tpu_custom_call.1} parent=35 // pred_check_branch
          %273 = sbr.rel (%p271) target = $region44
        $region43: #{tpu_custom_call.1} parent=35 // pred_region
          %p274 = scmp.lt.s32.totalorder %s21, 1
          %s275 = scalar_select %p274, %s21, 1
          %s276 = smul.addr %s275, 4
          %s277 = scalar_lea.vmem %s1, %s276
        $region44: #{tpu_custom_call.1} parent=35 // pred_fallthru
          _
      $region36: #{tpu_custom_call.1} parent=5 // pred_fallthru
        _
      %p278 = scmp.le.s32.totalorder 1, %s21
      %p279 = scmp.lt.s32.totalorder %s21, 3
      %p280 = pnand %p278, %p279
      %p281 = pneg %p280
      // Predicated region
      $region45: #{tpu_custom_call.1} parent=5 // pred_check
        _
      $region46: #{tpu_custom_call.1} parent=5 // pred_check_branch
        %283 = sbr.rel (%p280) target = $region48
      $region47: #{tpu_custom_call.1} parent=5 // pred_region
        %s284 = ssub.s32 %s21, 1
        %p285 = scmp.lt.s32.totalorder %s26, 1
        %s286 = scalar_select %p285, %s26, 1
        %s287 = smul.addr %s286, 4
        %s288 = scalar_lea.vmem %s0, %s287
        %p289 = pneg %p47
        %p290 = pneg %p44
        %p291 = scmp.lt.s32.totalorder %s26, 1
        %s292 = scalar_select %p291, %s26, 1
        %s293 = smul.addr %s292, 4
        %s294 = scalar_lea.vmem %s1, %s293
        %p295 = pneg %p73
        %p296 = pneg %p70
        %p297 = pneg %p94
        %p298 = pneg %p91
        %p299 = pneg %p115
        %p300 = pneg %p112
        %p301 = pneg %p136
        %p302 = pneg %p133
        %p303 = pneg %p157
        %p304 = pneg %p154
        %p305 = pneg %p178
        %p306 = pneg %p175
        %p307 = pneg %p204
        %p308 = pneg %p201
        %s309 = sand.u32 %s191, 1
        %s310 = scalar_lea.sflag [#allocation3], %s309
        %s311 = sand.u32 %s191, 1
        %s312 = smul.addr %s311, 8
        %s313 = scalar_lea.vmem [#allocation2], %s312
        %p314 = pneg %p230
        %p315 = pneg %p227
        %s316 = sand.u32 %s217, 1
        %s317 = scalar_lea.sflag [#allocation5], %s316
        %s318 = sand.u32 %s217, 1
        %s319 = smul.addr %s318, 32
        %s320 = scalar_lea.vmem [#allocation4], %s319
        %p321 = scmp.lt.s32.totalorder %s26, 1
        %s322 = scalar_select %p321, %s26, 1
        %s323 = smul.addr %s322, 4
        %s324 = scalar_lea.vmem %s0, %s323
        %p325 = scmp.lt.s32.totalorder %s26, 1
        %s326 = scalar_select %p325, %s26, 1
        %s327 = smul.addr %s326, 4
        %s328 = scalar_lea.vmem %s1, %s327
        %v330 = vld [vmem:[%s324] sm:$0xf]
        %v331 = vld [vmem:[%s328] sm:$0xf]
        %v332 = vld [vmem:[%s2] sm:$0xf]
        %v333 = vld [vmem:[%s2 + $0x4] sm:$0xf]
        %v334 = vld [vmem:[%s2 + $0x8] sm:$0xf]
        %v335 = vld [vmem:[%s2 + $0xc] sm:$0xf]
        %v340 = vunpack.c.l.b16 %v332
        %v341 = vunpack.c.l.b16 %v333
        %v342 = vunpack.c.l.b16 %v334
        %v343 = vunpack.c.l.b16 %v335
        %v344 = vpack.c.b16 %v341, %v340
        %v345 = vpack.c.b16 %v343, %v342
        %vm348 = vcmask 261120
        %v350 = vsel %vm348, %v330, 0
        %352 = vmatprep.subr.bf16.mxu0 0
        %353 = vmatpush1.bf16.msra.mxu0 %v344
        %354 = vmatprep.subr.bf16.mxu0 0
        %355 = vmatpush1.bf16.msra.mxu0 %v345
        %356 = vmatprep.subr.bf16.mxu0 0
        %357 = vmatpush1.bf16.msra.mxu0 0
        %358 = vmatprep.subr.bf16.mxu0 0
        %359 = vmatpush1.bf16.msra.mxu0 0
        %360 = vmatprep.subr.bf16.mxu0 0
        %361 = vmatpush1.bf16.msra.mxu0 0
        %362 = vmatprep.subr.bf16.mxu0 0
        %363 = vmatpush1.bf16.msra.mxu0 0
        %364 = vmatprep.subr.bf16.mxu0 0
        %365 = vmatpush1.bf16.msra.mxu0 0
        %366 = vmatprep.subr.bf16.mxu0 0
        %367 = vmatpush1.bf16.msra.mxu0 0
        %368 = vmatprep.subr.bf16.mxu0 0
        %369 = vmatpush1.bf16.msra.mxu0 0
        %370 = vmatprep.subr.bf16.mxu0 0
        %371 = vmatpush1.bf16.msra.mxu0 0
        %372 = vmatprep.subr.bf16.mxu0 0
        %373 = vmatpush1.bf16.msra.mxu0 0
        %374 = vmatprep.subr.bf16.mxu0 0
        %375 = vmatpush1.bf16.msra.mxu0 0
        %376 = vmatprep.subr.bf16.mxu0 0
        %377 = vmatpush1.bf16.msra.mxu0 0
        %378 = vmatprep.subr.bf16.mxu0 0
        %379 = vmatpush1.bf16.msra.mxu0 0
        %380 = vmatprep.subr.bf16.mxu0 0
        %381 = vmatpush1.bf16.msra.mxu0 0
        %382 = vmatprep.subr.bf16.mxu0 0
        %383 = vmatpush1.bf16.msra.mxu0 0
        %384 = vmatprep.mubr.bf16.mxu0 0
        %385 = vmatmul.mubr.bf16.gmra.mrb[0].mxu0 %v350
        %v386 = vpop.f32.mrb[0].mxu0
        %v387 = vadd.f32 0.0, %v386
        %v388 = vpop.f32.mrb[0].mxu0
        %v389 = vpop.f32.mrb[0].mxu0
        %v390 = vpop.f32.mrb[0].mxu0
        %391 = vdwg.mxu0
        %v392 = vpack.c.bf16 %v387, %v387
        %v393 = vld [vmem:[%s3] sm:$0xf]
        %v394 = vld [vmem:[%s3 + $0x4] sm:$0xf]
        %v395 = vld [vmem:[%s3 + $0x8] sm:$0xf]
        %v396 = vld [vmem:[%s3 + $0xc] sm:$0xf]
        %v401 = vunpack.c.l.b16 %v393
        %v402 = vunpack.c.l.b16 %v394
        %v403 = vunpack.c.l.b16 %v395
        %v404 = vunpack.c.l.b16 %v396
        %v405 = vpack.c.b16 %v402, %v401
        %v406 = vpack.c.b16 %v404, %v403
        %v410 = vsel %vm348, %v331, 0
        %412 = vmatprep.subr.bf16.mxu0 0
        %413 = vmatpush1.bf16.msra.mxu0 %v405
        %414 = vmatprep.subr.bf16.mxu0 0
        %415 = vmatpush1.bf16.msra.mxu0 %v406
        %416 = vmatprep.subr.bf16.mxu0 0
        %417 = vmatpush1.bf16.msra.mxu0 0
        %418 = vmatprep.subr.bf16.mxu0 0
        %419 = vmatpush1.bf16.msra.mxu0 0
        %420 = vmatprep.subr.bf16.mxu0 0
        %421 = vmatpush1.bf16.msra.mxu0 0
        %422 = vmatprep.subr.bf16.mxu0 0
        %423 = vmatpush1.bf16.msra.mxu0 0
        %424 = vmatprep.subr.bf16.mxu0 0
        %425 = vmatpush1.bf16.msra.mxu0 0
        %426 = vmatprep.subr.bf16.mxu0 0
        %427 = vmatpush1.bf16.msra.mxu0 0
        %428 = vmatprep.subr.bf16.mxu0 0
        %429 = vmatpush1.bf16.msra.mxu0 0
        %430 = vmatprep.subr.bf16.mxu0 0
        %431 = vmatpush1.bf16.msra.mxu0 0
        %432 = vmatprep.subr.bf16.mxu0 0
        %433 = vmatpush1.bf16.msra.mxu0 0
        %434 = vmatprep.subr.bf16.mxu0 0
        %435 = vmatpush1.bf16.msra.mxu0 0
        %436 = vmatprep.subr.bf16.mxu0 0
        %437 = vmatpush1.bf16.msra.mxu0 0
        %438 = vmatprep.subr.bf16.mxu0 0
        %439 = vmatpush1.bf16.msra.mxu0 0
        %440 = vmatprep.subr.bf16.mxu0 0
        %441 = vmatpush1.bf16.msra.mxu0 0
        %442 = vmatprep.subr.bf16.mxu0 0
        %443 = vmatpush1.bf16.msra.mxu0 0
        %444 = vmatprep.mubr.bf16.mxu0 0
        %445 = vmatmul.mubr.bf16.gmra.mrb[0].mxu0 %v410
        %v446 = vpop.f32.mrb[0].mxu0
        %v447 = vadd.f32 0.0, %v446
        %v448 = vpop.f32.mrb[0].mxu0
        %v449 = vpop.f32.mrb[0].mxu0
        %v450 = vpop.f32.mrb[0].mxu0
        %451 = vdwg.mxu0
        %v452 = vpack.c.bf16 %v447, %v447
        %v453 = vld [vmem:[%s4] sm:$0xf]
        %v454 = vld [vmem:[%s4 + $0x4] sm:$0xf]
        %v455 = vld [vmem:[%s4 + $0x8] sm:$0xf]
        %v456 = vld [vmem:[%s4 + $0xc] sm:$0xf]
        %v461 = vunpack.c.l.b16 %v453
        %v462 = vunpack.c.l.b16 %v454
        %v463 = vunpack.c.l.b16 %v455
        %v464 = vunpack.c.l.b16 %v456
        %v465 = vpack.c.b16 %v462, %v461
        %v466 = vpack.c.b16 %v464, %v463
        %469 = vmatprep.subr.bf16.mxu0 0
        %470 = vmatpush1.bf16.msra.mxu0 %v465
        %471 = vmatprep.subr.bf16.mxu0 0
        %472 = vmatpush1.bf16.msra.mxu0 %v466
        %473 = vmatprep.subr.bf16.mxu0 0
        %474 = vmatpush1.bf16.msra.mxu0 0
        %475 = vmatprep.subr.bf16.mxu0 0
        %476 = vmatpush1.bf16.msra.mxu0 0
        %477 = vmatprep.subr.bf16.mxu0 0
        %478 = vmatpush1.bf16.msra.mxu0 0
        %479 = vmatprep.subr.bf16.mxu0 0
        %480 = vmatpush1.bf16.msra.mxu0 0
        %481 = vmatprep.subr.bf16.mxu0 0
        %482 = vmatpush1.bf16.msra.mxu0 0
        %483 = vmatprep.subr.bf16.mxu0 0
        %484 = vmatpush1.bf16.msra.mxu0 0
        %485 = vmatprep.subr.bf16.mxu0 0
        %486 = vmatpush1.bf16.msra.mxu0 0
        %487 = vmatprep.subr.bf16.mxu0 0
        %488 = vmatpush1.bf16.msra.mxu0 0
        %489 = vmatprep.subr.bf16.mxu0 0
        %490 = vmatpush1.bf16.msra.mxu0 0
        %491 = vmatprep.subr.bf16.mxu0 0
        %492 = vmatpush1.bf16.msra.mxu0 0
        %493 = vmatprep.subr.bf16.mxu0 0
        %494 = vmatpush1.bf16.msra.mxu0 0
        %495 = vmatprep.subr.bf16.mxu0 0
        %496 = vmatpush1.bf16.msra.mxu0 0
        %497 = vmatprep.subr.bf16.mxu0 0
        %498 = vmatpush1.bf16.msra.mxu0 0
        %499 = vmatprep.subr.bf16.mxu0 0
        %500 = vmatpush1.bf16.msra.mxu0 0
        %501 = vmatprep.mubr.bf16.mxu0 0
        %502 = vmatmul.mubr.bf16.gmra.mrb[0].mxu0 %v410
        %v503 = vpop.f32.mrb[0].mxu0
        %v504 = vadd.f32 0.0, %v503
        %v505 = vpop.f32.mrb[0].mxu0
        %v506 = vpop.f32.mrb[0].mxu0
        %v507 = vpop.f32.mrb[0].mxu0
        %508 = vdwg.mxu0
        %v509 = vpack.c.bf16 %v504, %v504
        %vm510 = vcmask 64512
        %v512 = vsel %vm510, %v392, 0
        %v515 = vsel %vm510, %v452, 0
        %517 = vmatprep.subr.bf16.mxu0 0
        %518 = vmatpush1.bf16.xpose.msra.mxu0 %v515
        %519 = vmatprep.subr.bf16.mxu0 0
        %520 = vmatpush1.bf16.xpose.msra.mxu0 0
        %521 = vmatprep.subr.bf16.mxu0 0
        %522 = vmatpush1.bf16.xpose.msra.mxu0 0
        %523 = vmatprep.subr.bf16.mxu0 0
        %524 = vmatpush1.bf16.xpose.msra.mxu0 0
        %525 = vmatprep.subr.bf16.mxu0 0
        %526 = vmatpush1.bf16.xpose.msra.mxu0 0
        %527 = vmatprep.subr.bf16.mxu0 0
        %528 = vmatpush1.bf16.xpose.msra.mxu0 0
        %529 = vmatprep.subr.bf16.mxu0 0
        %530 = vmatpush1.bf16.xpose.msra.mxu0 0
        %531 = vmatprep.subr.bf16.mxu0 0
        %532 = vmatpush1.bf16.xpose.msra.mxu0 0
        %533 = vmatprep.subr.bf16.mxu0 0
        %534 = vmatpush1.bf16.xpose.msra.mxu0 0
        %535 = vmatprep.subr.bf16.mxu0 0
        %536 = vmatpush1.bf16.xpose.msra.mxu0 0
        %537 = vmatprep.subr.bf16.mxu0 0
        %538 = vmatpush1.bf16.xpose.msra.mxu0 0
        %539 = vmatprep.subr.bf16.mxu0 0
        %540 = vmatpush1.bf16.xpose.msra.mxu0 0
        %541 = vmatprep.subr.bf16.mxu0 0
        %542 = vmatpush1.bf16.xpose.msra.mxu0 0
        %543 = vmatprep.subr.bf16.mxu0 0
        %544 = vmatpush1.bf16.xpose.msra.mxu0 0
        %545 = vmatprep.subr.bf16.mxu0 0
        %546 = vmatpush1.bf16.xpose.msra.mxu0 0
        %547 = vmatprep.subr.bf16.mxu0 0
        %548 = vmatpush1.bf16.xpose.msra.mxu0 0
        %549 = vmatprep.mubr.bf16.mxu0 0
        %550 = vmatmul.mubr.bf16.gmra.mrb[0].mxu0 %v512
        %v551 = vpop.f32.mrb[0].mxu0
        %v552 = vadd.f32 0.0, %v551
        %v553 = vpop.f32.mrb[0].mxu0
        %v554 = vpop.f32.mrb[0].mxu0
        %v555 = vpop.f32.mrb[0].mxu0
        %556 = vdwg.mxu0
        %v557 = vsel %vm510, %v552, -inf
        %558 = vmax.xlane.f32.xlu0 %v557
        %v559 = vpop.xlane.xlu0 %558
        %v560 = vsub.f32 %v552, %v559
        %v561 = vmul.f32 %v560, 1.442695
        %v562 = vpow.pop %v561
        %v563 = vsel %vm510, %v562, 0.0
        %564 = vadd.xlane.f32.xlu0 %v563
        %v565 = vpop.xlane.xlu0 %564
        %v566 = vrcp.pop %v565
        %v567 = vmul.f32 %v562, %v566
        %568 = vst.msk [vmem:[%s320] sm:$0xff] %vm510, %v567
        %v569 = vpack.c.bf16 %v567, %v567
        %v571 = vsel %vm510, %v569, 0
        %vm573 = vcmask 1043456
        %v575 = vsel %vm573, %v509, 0
        %577 = vmatprep.subr.bf16.mxu0 0
        %578 = vmatpush1.bf16.msra.mxu0 %v575
        %579 = vmatprep.subr.bf16.mxu0 0
        %580 = vmatpush1.bf16.msra.mxu0 0
        %581 = vmatprep.subr.bf16.mxu0 0
        %582 = vmatpush1.bf16.msra.mxu0 0
        %583 = vmatprep.subr.bf16.mxu0 0
        %584 = vmatpush1.bf16.msra.mxu0 0
        %585 = vmatprep.subr.bf16.mxu0 0
        %586 = vmatpush1.bf16.msra.mxu0 0
        %587 = vmatprep.subr.bf16.mxu0 0
        %588 = vmatpush1.bf16.msra.mxu0 0
        %589 = vmatprep.subr.bf16.mxu0 0
        %590 = vmatpush1.bf16.msra.mxu0 0
        %591 = vmatprep.subr.bf16.mxu0 0
        %592 = vmatpush1.bf16.msra.mxu0 0
        %593 = vmatprep.subr.bf16.mxu0 0
        %594 = vmatpush1.bf16.msra.mxu0 0
        %595 = vmatprep.subr.bf16.mxu0 0
        %596 = vmatpush1.bf16.msra.mxu0 0
        %597 = vmatprep.subr.bf16.mxu0 0
        %598 = vmatpush1.bf16.msra.mxu0 0
        %599 = vmatprep.subr.bf16.mxu0 0
        %600 = vmatpush1.bf16.msra.mxu0 0
        %601 = vmatprep.subr.bf16.mxu0 0
        %602 = vmatpush1.bf16.msra.mxu0 0
        %603 = vmatprep.subr.bf16.mxu0 0
        %604 = vmatpush1.bf16.msra.mxu0 0
        %605 = vmatprep.subr.bf16.mxu0 0
        %606 = vmatpush1.bf16.msra.mxu0 0
        %607 = vmatprep.subr.bf16.mxu0 0
        %608 = vmatpush1.bf16.msra.mxu0 0
        %609 = vmatprep.mubr.bf16.mxu0 0
        %610 = vmatmul.mubr.bf16.gmra.mrb[0].mxu0 %v571
        %v611 = vpop.f32.mrb[0].mxu0
        %v612 = vadd.f32 0.0, %v611
        %v613 = vpop.f32.mrb[0].mxu0
        %v614 = vpop.f32.mrb[0].mxu0
        %v615 = vpop.f32.mrb[0].mxu0
        %616 = vdwg.mxu0
        %v617 = vpack.c.bf16 %v612, %v612
        %v618 = vld [vmem:[%s5] sm:$0xf]
        %s619 = scalar_lea.vmem %s2, 16
        %v620 = vld [vmem:[%s619] sm:$0xf]
        %v621 = vld [vmem:[%s619 + $0x4] sm:$0xf]
        %v622 = vld [vmem:[%s619 + $0x8] sm:$0xf]
        %v623 = vld [vmem:[%s619 + $0xc] sm:$0xf]
        %v628 = vunpack.c.l.b16 %v620
        %v629 = vunpack.c.l.b16 %v621
        %v630 = vunpack.c.l.b16 %v622
        %v631 = vunpack.c.l.b16 %v623
        %v632 = vpack.c.b16 %v629, %v628
        %v633 = vpack.c.b16 %v631, %v630
        %636 = vmatprep.subr.bf16.mxu0 0
        %637 = vmatpush1.bf16.msra.mxu0 %v632
        %638 = vmatprep.subr.bf16.mxu0 0
        %639 = vmatpush1.bf16.msra.mxu0 %v633
        %640 = vmatprep.subr.bf16.mxu0 0
        %641 = vmatpush1.bf16.msra.mxu0 0
        %642 = vmatprep.subr.bf16.mxu0 0
        %643 = vmatpush1.bf16.msra.mxu0 0
        %644 = vmatprep.subr.bf16.mxu0 0
        %645 = vmatpush1.bf16.msra.mxu0 0
        %646 = vmatprep.subr.bf16.mxu0 0
        %647 = vmatpush1.bf16.msra.mxu0 0
        %648 = vmatprep.subr.bf16.mxu0 0
        %649 = vmatpush1.bf16.msra.mxu0 0
        %650 = vmatprep.subr.bf16.mxu0 0
        %651 = vmatpush1.bf16.msra.mxu0 0
        %652 = vmatprep.subr.bf16.mxu0 0
        %653 = vmatpush1.bf16.msra.mxu0 0
        %654 = vmatprep.subr.bf16.mxu0 0
        %655 = vmatpush1.bf16.msra.mxu0 0
        %656 = vmatprep.subr.bf16.mxu0 0
        %657 = vmatpush1.bf16.msra.mxu0 0
        %658 = vmatprep.subr.bf16.mxu0 0
        %659 = vmatpush1.bf16.msra.mxu0 0
        %660 = vmatprep.subr.bf16.mxu0 0
        %661 = vmatpush1.bf16.msra.mxu0 0
        %662 = vmatprep.subr.bf16.mxu0 0
        %663 = vmatpush1.bf16.msra.mxu0 0
        %664 = vmatprep.subr.bf16.mxu0 0
        %665 = vmatpush1.bf16.msra.mxu0 0
        %666 = vmatprep.subr.bf16.mxu0 0
        %667 = vmatpush1.bf16.msra.mxu0 0
        %668 = vmatprep.mubr.bf16.mxu0 0
        %669 = vmatmul.mubr.bf16.gmra.mrb[0].mxu0 %v350
        %v670 = vpop.f32.mrb[0].mxu0
        %v671 = vadd.f32 0.0, %v670
        %v672 = vpop.f32.mrb[0].mxu0
        %v673 = vpop.f32.mrb[0].mxu0
        %v674 = vpop.f32.mrb[0].mxu0
        %675 = vdwg.mxu0
        %v676 = vpack.c.bf16 %v671, %v671
        %s677 = scalar_lea.vmem %s3, 16
        %v678 = vld [vmem:[%s677] sm:$0xf]
        %v679 = vld [vmem:[%s677 + $0x4] sm:$0xf]
        %v680 = vld [vmem:[%s677 + $0x8] sm:$0xf]
        %v681 = vld [vmem:[%s677 + $0xc] sm:$0xf]
        %v686 = vunpack.c.l.b16 %v678
        %v687 = vunpack.c.l.b16 %v679
        %v688 = vunpack.c.l.b16 %v680
        %v689 = vunpack.c.l.b16 %v681
        %v690 = vpack.c.b16 %v687, %v686
        %v691 = vpack.c.b16 %v689, %v688
        %694 = vmatprep.subr.bf16.mxu0 0
        %695 = vmatpush1.bf16.msra.mxu0 %v690
        %696 = vmatprep.subr.bf16.mxu0 0
        %697 = vmatpush1.bf16.msra.mxu0 %v691
        %698 = vmatprep.subr.bf16.mxu0 0
        %699 = vmatpush1.bf16.msra.mxu0 0
        %700 = vmatprep.subr.bf16.mxu0 0
        %701 = vmatpush1.bf16.msra.mxu0 0
        %702 = vmatprep.subr.bf16.mxu0 0
        %703 = vmatpush1.bf16.msra.mxu0 0
        %704 = vmatprep.subr.bf16.mxu0 0
        %705 = vmatpush1.bf16.msra.mxu0 0
        %706 = vmatprep.subr.bf16.mxu0 0
        %707 = vmatpush1.bf16.msra.mxu0 0
        %708 = vmatprep.subr.bf16.mxu0 0
        %709 = vmatpush1.bf16.msra.mxu0 0
        %710 = vmatprep.subr.bf16.mxu0 0
        %711 = vmatpush1.bf16.msra.mxu0 0
        %712 = vmatprep.subr.bf16.mxu0 0
        %713 = vmatpush1.bf16.msra.mxu0 0
        %714 = vmatprep.subr.bf16.mxu0 0
        %715 = vmatpush1.bf16.msra.mxu0 0
        %716 = vmatprep.subr.bf16.mxu0 0
        %717 = vmatpush1.bf16.msra.mxu0 0
        %718 = vmatprep.subr.bf16.mxu0 0
        %719 = vmatpush1.bf16.msra.mxu0 0
        %720 = vmatprep.subr.bf16.mxu0 0
        %721 = vmatpush1.bf16.msra.mxu0 0
        %722 = vmatprep.subr.bf16.mxu0 0
        %723 = vmatpush1.bf16.msra.mxu0 0
        %724 = vmatprep.subr.bf16.mxu0 0
        %725 = vmatpush1.bf16.msra.mxu0 0
        %726 = vmatprep.mubr.bf16.mxu0 0
        %727 = vmatmul.mubr.bf16.gmra.mrb[0].mxu0 %v410
        %v728 = vpop.f32.mrb[0].mxu0
        %v729 = vadd.f32 0.0, %v728
        %v730 = vpop.f32.mrb[0].mxu0
        %v731 = vpop.f32.mrb[0].mxu0
        %v732 = vpop.f32.mrb[0].mxu0
        %733 = vdwg.mxu0
        %v734 = vpack.c.bf16 %v729, %v729
        %s735 = scalar_lea.vmem %s4, 16
        %v736 = vld [vmem:[%s735] sm:$0xf]
        %v737 = vld [vmem:[%s735 + $0x4] sm:$0xf]
        %v738 = vld [vmem:[%s735 + $0x8] sm:$0xf]
        %v739 = vld [vmem:[%s735 + $0xc] sm:$0xf]
        %v744 = vunpack.c.l.b16 %v736
        %v745 = vunpack.c.l.b16 %v737
        %v746 = vunpack.c.l.b16 %v738
        %v747 = vunpack.c.l.b16 %v739
        %v748 = vpack.c.b16 %v745, %v744
        %v749 = vpack.c.b16 %v747, %v746
        %752 = vmatprep.subr.bf16.mxu0 0
        %753 = vmatpush1.bf16.msra.mxu0 %v748
        %754 = vmatprep.subr.bf16.mxu0 0
        %755 = vmatpush1.bf16.msra.mxu0 %v749
        %756 = vmatprep.subr.bf16.mxu0 0
        %757 = vmatpush1.bf16.msra.mxu0 0
        %758 = vmatprep.subr.bf16.mxu0 0
        %759 = vmatpush1.bf16.msra.mxu0 0
        %760 = vmatprep.subr.bf16.mxu0 0
        %761 = vmatpush1.bf16.msra.mxu0 0
        %762 = vmatprep.subr.bf16.mxu0 0
        %763 = vmatpush1.bf16.msra.mxu0 0
        %764 = vmatprep.subr.bf16.mxu0 0
        %765 = vmatpush1.bf16.msra.mxu0 0
        %766 = vmatprep.subr.bf16.mxu0 0
        %767 = vmatpush1.bf16.msra.mxu0 0
        %768 = vmatprep.subr.bf16.mxu0 0
        %769 = vmatpush1.bf16.msra.mxu0 0
        %770 = vmatprep.subr.bf16.mxu0 0
        %771 = vmatpush1.bf16.msra.mxu0 0
        %772 = vmatprep.subr.bf16.mxu0 0
        %773 = vmatpush1.bf16.msra.mxu0 0
        %774 = vmatprep.subr.bf16.mxu0 0
        %775 = vmatpush1.bf16.msra.mxu0 0
        %776 = vmatprep.subr.bf16.mxu0 0
        %777 = vmatpush1.bf16.msra.mxu0 0
        %778 = vmatprep.subr.bf16.mxu0 0
        %779 = vmatpush1.bf16.msra.mxu0 0
        %780 = vmatprep.subr.bf16.mxu0 0
        %781 = vmatpush1.bf16.msra.mxu0 0
        %782 = vmatprep.subr.bf16.mxu0 0
        %783 = vmatpush1.bf16.msra.mxu0 0
        %784 = vmatprep.mubr.bf16.mxu0 0
        %785 = vmatmul.mubr.bf16.gmra.mrb[0].mxu0 %v410
        %v786 = vpop.f32.mrb[0].mxu0
        %v787 = vadd.f32 0.0, %v786
        %v788 = vpop.f32.mrb[0].mxu0
        %v789 = vpop.f32.mrb[0].mxu0
        %v790 = vpop.f32.mrb[0].mxu0
        %791 = vdwg.mxu0
        %v792 = vpack.c.bf16 %v787, %v787
        %v794 = vsel %vm510, %v676, 0
        %v797 = vsel %vm510, %v734, 0
        %799 = vmatprep.subr.bf16.mxu0 0
        %800 = vmatpush1.bf16.xpose.msra.mxu0 %v797
        %801 = vmatprep.subr.bf16.mxu0 0
        %802 = vmatpush1.bf16.xpose.msra.mxu0 0
        %803 = vmatprep.subr.bf16.mxu0 0
        %804 = vmatpush1.bf16.xpose.msra.mxu0 0
        %805 = vmatprep.subr.bf16.mxu0 0
        %806 = vmatpush1.bf16.xpose.msra.mxu0 0
        %807 = vmatprep.subr.bf16.mxu0 0
        %808 = vmatpush1.bf16.xpose.msra.mxu0 0
        %809 = vmatprep.subr.bf16.mxu0 0
        %810 = vmatpush1.bf16.xpose.msra.mxu0 0
        %811 = vmatprep.subr.bf16.mxu0 0
        %812 = vmatpush1.bf16.xpose.msra.mxu0 0
        %813 = vmatprep.subr.bf16.mxu0 0
        %814 = vmatpush1.bf16.xpose.msra.mxu0 0
        %815 = vmatprep.subr.bf16.mxu0 0
        %816 = vmatpush1.bf16.xpose.msra.mxu0 0
        %817 = vmatprep.subr.bf16.mxu0 0
        %818 = vmatpush1.bf16.xpose.msra.mxu0 0
        %819 = vmatprep.subr.bf16.mxu0 0
        %820 = vmatpush1.bf16.xpose.msra.mxu0 0
        %821 = vmatprep.subr.bf16.mxu0 0
        %822 = vmatpush1.bf16.xpose.msra.mxu0 0
        %823 = vmatprep.subr.bf16.mxu0 0
        %824 = vmatpush1.bf16.xpose.msra.mxu0 0
        %825 = vmatprep.subr.bf16.mxu0 0
        %826 = vmatpush1.bf16.xpose.msra.mxu0 0
        %827 = vmatprep.subr.bf16.mxu0 0
        %828 = vmatpush1.bf16.xpose.msra.mxu0 0
        %829 = vmatprep.subr.bf16.mxu0 0
        %830 = vmatpush1.bf16.xpose.msra.mxu0 0
        %831 = vmatprep.mubr.bf16.mxu0 0
        %832 = vmatmul.mubr.bf16.gmra.mrb[0].mxu0 %v794
        %v833 = vpop.f32.mrb[0].mxu0
        %v834 = vadd.f32 0.0, %v833
        %v835 = vpop.f32.mrb[0].mxu0
        %v836 = vpop.f32.mrb[0].mxu0
        %v837 = vpop.f32.mrb[0].mxu0
        %838 = vdwg.mxu0
        %v839 = vsel %vm510, %v834, -inf
        %840 = vmax.xlane.f32.xlu0 %v839
        %v841 = vpop.xlane.xlu0 %840
        %v842 = vsub.f32 %v834, %v841
        %v843 = vmul.f32 %v842, 1.442695
        %v844 = vpow.pop %v843
        %v845 = vsel %vm510, %v844, 0.0
        %846 = vadd.xlane.f32.xlu0 %v845
        %v847 = vpop.xlane.xlu0 %846
        %v848 = vrcp.pop %v847
        %v849 = vmul.f32 %v844, %v848
        %s850 = scalar_lea.vmem %s320, 8 [#allocation4]
        %851 = vst.msk [vmem:[%s850] sm:$0xff] %vm510, %v849
        %v852 = vpack.c.bf16 %v849, %v849
        %v854 = vsel %vm510, %v852, 0
        %v857 = vsel %vm573, %v792, 0
        %859 = vmatprep.subr.bf16.mxu0 0
        %860 = vmatpush1.bf16.msra.mxu0 %v857
        %861 = vmatprep.subr.bf16.mxu0 0
        %862 = vmatpush1.bf16.msra.mxu0 0
        %863 = vmatprep.subr.bf16.mxu0 0
        %864 = vmatpush1.bf16.msra.mxu0 0
        %865 = vmatprep.subr.bf16.mxu0 0
        %866 = vmatpush1.bf16.msra.mxu0 0
        %867 = vmatprep.subr.bf16.mxu0 0
        %868 = vmatpush1.bf16.msra.mxu0 0
        %869 = vmatprep.subr.bf16.mxu0 0
        %870 = vmatpush1.bf16.msra.mxu0 0
        %871 = vmatprep.subr.bf16.mxu0 0
        %872 = vmatpush1.bf16.msra.mxu0 0
        %873 = vmatprep.subr.bf16.mxu0 0
        %874 = vmatpush1.bf16.msra.mxu0 0
        %875 = vmatprep.subr.bf16.mxu0 0
        %876 = vmatpush1.bf16.msra.mxu0 0
        %877 = vmatprep.subr.bf16.mxu0 0
        %878 = vmatpush1.bf16.msra.mxu0 0
        %879 = vmatprep.subr.bf16.mxu0 0
        %880 = vmatpush1.bf16.msra.mxu0 0
        %881 = vmatprep.subr.bf16.mxu0 0
        %882 = vmatpush1.bf16.msra.mxu0 0
        %883 = vmatprep.subr.bf16.mxu0 0
        %884 = vmatpush1.bf16.msra.mxu0 0
        %885 = vmatprep.subr.bf16.mxu0 0
        %886 = vmatpush1.bf16.msra.mxu0 0
        %887 = vmatprep.subr.bf16.mxu0 0
        %888 = vmatpush1.bf16.msra.mxu0 0
        %889 = vmatprep.subr.bf16.mxu0 0
        %890 = vmatpush1.bf16.msra.mxu0 0
        %891 = vmatprep.mubr.bf16.mxu0 0
        %892 = vmatmul.mubr.bf16.gmra.mrb[0].mxu0 %v854
        %v893 = vpop.f32.mrb[0].mxu0
        %v894 = vadd.f32 0.0, %v893
        %v895 = vpop.f32.mrb[0].mxu0
        %v896 = vpop.f32.mrb[0].mxu0
        %v897 = vpop.f32.mrb[0].mxu0
        %898 = vdwg.mxu0
        %v899 = vpack.c.bf16 %v894, %v894
        %s900 = scalar_lea.vmem %s5, 4
        %v901 = vld [vmem:[%s900] sm:$0xf]
        %v903 = vsel %vm510, %v899, 0
        %v906 = vsel %vm573, %v901, 0
        %908 = vmatprep.subr.bf16.mxu0 0
        %909 = vmatpush1.bf16.msra.mxu0 %v906
        %910 = vmatprep.subr.bf16.mxu0 0
        %911 = vmatpush1.bf16.msra.mxu0 0
        %912 = vmatprep.subr.bf16.mxu0 0
        %913 = vmatpush1.bf16.msra.mxu0 0
        %914 = vmatprep.subr.bf16.mxu0 0
        %915 = vmatpush1.bf16.msra.mxu0 0
        %916 = vmatprep.subr.bf16.mxu0 0
        %917 = vmatpush1.bf16.msra.mxu0 0
        %918 = vmatprep.subr.bf16.mxu0 0
        %919 = vmatpush1.bf16.msra.mxu0 0
        %920 = vmatprep.subr.bf16.mxu0 0
        %921 = vmatpush1.bf16.msra.mxu0 0
        %922 = vmatprep.subr.bf16.mxu0 0
        %923 = vmatpush1.bf16.msra.mxu0 0
        %924 = vmatprep.subr.bf16.mxu0 0
        %925 = vmatpush1.bf16.msra.mxu0 0
        %926 = vmatprep.subr.bf16.mxu0 0
        %927 = vmatpush1.bf16.msra.mxu0 0
        %928 = vmatprep.subr.bf16.mxu0 0
        %929 = vmatpush1.bf16.msra.mxu0 0
        %930 = vmatprep.subr.bf16.mxu0 0
        %931 = vmatpush1.bf16.msra.mxu0 0
        %932 = vmatprep.subr.bf16.mxu0 0
        %933 = vmatpush1.bf16.msra.mxu0 0
        %934 = vmatprep.subr.bf16.mxu0 0
        %935 = vmatpush1.bf16.msra.mxu0 0
        %936 = vmatprep.subr.bf16.mxu0 0
        %937 = vmatpush1.bf16.msra.mxu0 0
        %938 = vmatprep.subr.bf16.mxu0 0
        %939 = vmatpush1.bf16.msra.mxu0 0
        %940 = vmatprep.mubr.bf16.mxu0 0
        %941 = vmatmul.mubr.bf16.gmra.mrb[0].mxu0 %v903
        %v942 = vpop.f32.mrb[0].mxu0
        %v943 = vadd.f32 0.0, %v942
        %v944 = vpop.f32.mrb[0].mxu0
        %v945 = vpop.f32.mrb[0].mxu0
        %v946 = vpop.f32.mrb[0].mxu0
        %947 = vdwg.mxu0
        %v949 = vsel %vm510, %v617, 0
        %v952 = vsel %vm573, %v618, 0
        %954 = vmatprep.subr.bf16.mxu0 0
        %955 = vmatpush1.bf16.msra.mxu0 %v952
        %956 = vmatprep.subr.bf16.mxu0 0
        %957 = vmatpush1.bf16.msra.mxu0 0
        %958 = vmatprep.subr.bf16.mxu0 0
        %959 = vmatpush1.bf16.msra.mxu0 0
        %960 = vmatprep.subr.bf16.mxu0 0
        %961 = vmatpush1.bf16.msra.mxu0 0
        %962 = vmatprep.subr.bf16.mxu0 0
        %963 = vmatpush1.bf16.msra.mxu0 0
        %964 = vmatprep.subr.bf16.mxu0 0
        %965 = vmatpush1.bf16.msra.mxu0 0
        %966 = vmatprep.subr.bf16.mxu0 0
        %967 = vmatpush1.bf16.msra.mxu0 0
        %968 = vmatprep.subr.bf16.mxu0 0
        %969 = vmatpush1.bf16.msra.mxu0 0
        %970 = vmatprep.subr.bf16.mxu0 0
        %971 = vmatpush1.bf16.msra.mxu0 0
        %972 = vmatprep.subr.bf16.mxu0 0
        %973 = vmatpush1.bf16.msra.mxu0 0
        %974 = vmatprep.subr.bf16.mxu0 0
        %975 = vmatpush1.bf16.msra.mxu0 0
        %976 = vmatprep.subr.bf16.mxu0 0
        %977 = vmatpush1.bf16.msra.mxu0 0
        %978 = vmatprep.subr.bf16.mxu0 0
        %979 = vmatpush1.bf16.msra.mxu0 0
        %980 = vmatprep.subr.bf16.mxu0 0
        %981 = vmatpush1.bf16.msra.mxu0 0
        %982 = vmatprep.subr.bf16.mxu0 0
        %983 = vmatpush1.bf16.msra.mxu0 0
        %984 = vmatprep.subr.bf16.mxu0 0
        %985 = vmatpush1.bf16.msra.mxu0 0
        %986 = vmatprep.mubr.bf16.mxu0 0
        %987 = vmatmul.mubr.bf16.gmra.mrb[0].mxu0 %v949
        %v988 = vpop.f32.mrb[0].mxu0
        %v989 = vadd.f32 %v943, %v988
        %v990 = vpop.f32.mrb[0].mxu0
        %v991 = vpop.f32.mrb[0].mxu0
        %v992 = vpop.f32.mrb[0].mxu0
        %993 = vdwg.mxu0
        %s994 = scalar_lea.vmem %s2, 32
        %v995 = vld [vmem:[%s994] sm:$0xf]
        %v996 = vld [vmem:[%s994 + $0x4] sm:$0xf]
        %v997 = vld [vmem:[%s994 + $0x8] sm:$0xf]
        %v998 = vld [vmem:[%s994 + $0xc] sm:$0xf]
        %v1003 = vunpack.c.l.b16 %v995
        %v1004 = vunpack.c.l.b16 %v996
        %v1005 = vunpack.c.l.b16 %v997
        %v1006 = vunpack.c.l.b16 %v998
        %v1007 = vpack.c.b16 %v1004, %v1003
        %v1008 = vpack.c.b16 %v1006, %v1005
        %1011 = vmatprep.subr.bf16.mxu0 0
        %1012 = vmatpush1.bf16.msra.mxu0 %v1007
        %1013 = vmatprep.subr.bf16.mxu0 0
        %1014 = vmatpush1.bf16.msra.mxu0 %v1008
        %1015 = vmatprep.subr.bf16.mxu0 0
        %1016 = vmatpush1.bf16.msra.mxu0 0
        %1017 = vmatprep.subr.bf16.mxu0 0
        %1018 = vmatpush1.bf16.msra.mxu0 0
        %1019 = vmatprep.subr.bf16.mxu0 0
        %1020 = vmatpush1.bf16.msra.mxu0 0
        %1021 = vmatprep.subr.bf16.mxu0 0
        %1022 = vmatpush1.bf16.msra.mxu0 0
        %1023 = vmatprep.subr.bf16.mxu0 0
        %1024 = vmatpush1.bf16.msra.mxu0 0
        %1025 = vmatprep.subr.bf16.mxu0 0
        %1026 = vmatpush1.bf16.msra.mxu0 0
        %1027 = vmatprep.subr.bf16.mxu0 0
        %1028 = vmatpush1.bf16.msra.mxu0 0
        %1029 = vmatprep.subr.bf16.mxu0 0
        %1030 = vmatpush1.bf16.msra.mxu0 0
        %1031 = vmatprep.subr.bf16.mxu0 0
        %1032 = vmatpush1.bf16.msra.mxu0 0
        %1033 = vmatprep.subr.bf16.mxu0 0
        %1034 = vmatpush1.bf16.msra.mxu0 0
        %1035 = vmatprep.subr.bf16.mxu0 0
        %1036 = vmatpush1.bf16.msra.mxu0 0
        %1037 = vmatprep.subr.bf16.mxu0 0
        %1038 = vmatpush1.bf16.msra.mxu0 0
        %1039 = vmatprep.subr.bf16.mxu0 0
        %1040 = vmatpush1.bf16.msra.mxu0 0
        %1041 = vmatprep.subr.bf16.mxu0 0
        %1042 = vmatpush1.bf16.msra.mxu0 0
        %1043 = vmatprep.mubr.bf16.mxu0 0
        %1044 = vmatmul.mubr.bf16.gmra.mrb[0].mxu0 %v350
        %v1045 = vpop.f32.mrb[0].mxu0
        %v1046 = vadd.f32 0.0, %v1045
        %v1047 = vpop.f32.mrb[0].mxu0
        %v1048 = vpop.f32.mrb[0].mxu0
        %v1049 = vpop.f32.mrb[0].mxu0
        %1050 = vdwg.mxu0
        %v1051 = vpack.c.bf16 %v1046, %v1046
        %s1052 = scalar_lea.vmem %s3, 32
        %v1053 = vld [vmem:[%s1052] sm:$0xf]
        %v1054 = vld [vmem:[%s1052 + $0x4] sm:$0xf]
        %v1055 = vld [vmem:[%s1052 + $0x8] sm:$0xf]
        %v1056 = vld [vmem:[%s1052 + $0xc] sm:$0xf]
        %v1061 = vunpack.c.l.b16 %v1053
        %v1062 = vunpack.c.l.b16 %v1054
        %v1063 = vunpack.c.l.b16 %v1055
        %v1064 = vunpack.c.l.b16 %v1056
        %v1065 = vpack.c.b16 %v1062, %v1061
        %v1066 = vpack.c.b16 %v1064, %v1063
        %1069 = vmatprep.subr.bf16.mxu0 0
        %1070 = vmatpush1.bf16.msra.mxu0 %v1065
        %1071 = vmatprep.subr.bf16.mxu0 0
        %1072 = vmatpush1.bf16.msra.mxu0 %v1066
        %1073 = vmatprep.subr.bf16.mxu0 0
        %1074 = vmatpush1.bf16.msra.mxu0 0
        %1075 = vmatprep.subr.bf16.mxu0 0
        %1076 = vmatpush1.bf16.msra.mxu0 0
        %1077 = vmatprep.subr.bf16.mxu0 0
        %1078 = vmatpush1.bf16.msra.mxu0 0
        %1079 = vmatprep.subr.bf16.mxu0 0
        %1080 = vmatpush1.bf16.msra.mxu0 0
        %1081 = vmatprep.subr.bf16.mxu0 0
        %1082 = vmatpush1.bf16.msra.mxu0 0
        %1083 = vmatprep.subr.bf16.mxu0 0
        %1084 = vmatpush1.bf16.msra.mxu0 0
        %1085 = vmatprep.subr.bf16.mxu0 0
        %1086 = vmatpush1.bf16.msra.mxu0 0
        %1087 = vmatprep.subr.bf16.mxu0 0
        %1088 = vmatpush1.bf16.msra.mxu0 0
        %1089 = vmatprep.subr.bf16.mxu0 0
        %1090 = vmatpush1.bf16.msra.mxu0 0
        %1091 = vmatprep.subr.bf16.mxu0 0
        %1092 = vmatpush1.bf16.msra.mxu0 0
        %1093 = vmatprep.subr.bf16.mxu0 0
        %1094 = vmatpush1.bf16.msra.mxu0 0
        %1095 = vmatprep.subr.bf16.mxu0 0
        %1096 = vmatpush1.bf16.msra.mxu0 0
        %1097 = vmatprep.subr.bf16.mxu0 0
        %1098 = vmatpush1.bf16.msra.mxu0 0
        %1099 = vmatprep.subr.bf16.mxu0 0
        %1100 = vmatpush1.bf16.msra.mxu0 0
        %1101 = vmatprep.mubr.bf16.mxu0 0
        %1102 = vmatmul.mubr.bf16.gmra.mrb[0].mxu0 %v410
        %v1103 = vpop.f32.mrb[0].mxu0
        %v1104 = vadd.f32 0.0, %v1103
        %v1105 = vpop.f32.mrb[0].mxu0
        %v1106 = vpop.f32.mrb[0].mxu0
        %v1107 = vpop.f32.mrb[0].mxu0
        %1108 = vdwg.mxu0
        %v1109 = vpack.c.bf16 %v1104, %v1104
        %s1110 = scalar_lea.vmem %s4, 32
        %v1111 = vld [vmem:[%s1110] sm:$0xf]
        %v1112 = vld [vmem:[%s1110 + $0x4] sm:$0xf]
        %v1113 = vld [vmem:[%s1110 + $0x8] sm:$0xf]
        %v1114 = vld [vmem:[%s1110 + $0xc] sm:$0xf]
        %v1119 = vunpack.c.l.b16 %v1111
        %v1120 = vunpack.c.l.b16 %v1112
        %v1121 = vunpack.c.l.b16 %v1113
        %v1122 = vunpack.c.l.b16 %v1114
        %v1123 = vpack.c.b16 %v1120, %v1119
        %v1124 = vpack.c.b16 %v1122, %v1121
        %1127 = vmatprep.subr.bf16.mxu0 0
        %1128 = vmatpush1.bf16.msra.mxu0 %v1123
        %1129 = vmatprep.subr.bf16.mxu0 0
        %1130 = vmatpush1.bf16.msra.mxu0 %v1124
        %1131 = vmatprep.subr.bf16.mxu0 0
        %1132 = vmatpush1.bf16.msra.mxu0 0
        %1133 = vmatprep.subr.bf16.mxu0 0
        %1134 = vmatpush1.bf16.msra.mxu0 0
        %1135 = vmatprep.subr.bf16.mxu0 0
        %1136 = vmatpush1.bf16.msra.mxu0 0
        %1137 = vmatprep.subr.bf16.mxu0 0
        %1138 = vmatpush1.bf16.msra.mxu0 0
        %1139 = vmatprep.subr.bf16.mxu0 0
        %1140 = vmatpush1.bf16.msra.mxu0 0
        %1141 = vmatprep.subr.bf16.mxu0 0
        %1142 = vmatpush1.bf16.msra.mxu0 0
        %1143 = vmatprep.subr.bf16.mxu0 0
        %1144 = vmatpush1.bf16.msra.mxu0 0
        %1145 = vmatprep.subr.bf16.mxu0 0
        %1146 = vmatpush1.bf16.msra.mxu0 0
        %1147 = vmatprep.subr.bf16.mxu0 0
        %1148 = vmatpush1.bf16.msra.mxu0 0
        %1149 = vmatprep.subr.bf16.mxu0 0
        %1150 = vmatpush1.bf16.msra.mxu0 0
        %1151 = vmatprep.subr.bf16.mxu0 0
        %1152 = vmatpush1.bf16.msra.mxu0 0
        %1153 = vmatprep.subr.bf16.mxu0 0
        %1154 = vmatpush1.bf16.msra.mxu0 0
        %1155 = vmatprep.subr.bf16.mxu0 0
        %1156 = vmatpush1.bf16.msra.mxu0 0
        %1157 = vmatprep.subr.bf16.mxu0 0
        %1158 = vmatpush1.bf16.msra.mxu0 0
        %1159 = vmatprep.mubr.bf16.mxu0 0
        %1160 = vmatmul.mubr.bf16.gmra.mrb[0].mxu0 %v410
        %v1161 = vpop.f32.mrb[0].mxu0
        %v1162 = vadd.f32 0.0, %v1161
        %v1163 = vpop.f32.mrb[0].mxu0
        %v1164 = vpop.f32.mrb[0].mxu0
        %v1165 = vpop.f32.mrb[0].mxu0
        %1166 = vdwg.mxu0
        %v1167 = vpack.c.bf16 %v1162, %v1162
        %v1169 = vsel %vm510, %v1051, 0
        %v1172 = vsel %vm510, %v1109, 0
        %1174 = vmatprep.subr.bf16.mxu0 0
        %1175 = vmatpush1.bf16.xpose.msra.mxu0 %v1172
        %1176 = vmatprep.subr.bf16.mxu0 0
        %1177 = vmatpush1.bf16.xpose.msra.mxu0 0
        %1178 = vmatprep.subr.bf16.mxu0 0
        %1179 = vmatpush1.bf16.xpose.msra.mxu0 0
        %1180 = vmatprep.subr.bf16.mxu0 0
        %1181 = vmatpush1.bf16.xpose.msra.mxu0 0
        %1182 = vmatprep.subr.bf16.mxu0 0
        %1183 = vmatpush1.bf16.xpose.msra.mxu0 0
        %1184 = vmatprep.subr.bf16.mxu0 0
        %1185 = vmatpush1.bf16.xpose.msra.mxu0 0
        %1186 = vmatprep.subr.bf16.mxu0 0
        %1187 = vmatpush1.bf16.xpose.msra.mxu0 0
        %1188 = vmatprep.subr.bf16.mxu0 0
        %1189 = vmatpush1.bf16.xpose.msra.mxu0 0
        %1190 = vmatprep.subr.bf16.mxu0 0
        %1191 = vmatpush1.bf16.xpose.msra.mxu0 0
        %1192 = vmatprep.subr.bf16.mxu0 0
        %1193 = vmatpush1.bf16.xpose.msra.mxu0 0
        %1194 = vmatprep.subr.bf16.mxu0 0
        %1195 = vmatpush1.bf16.xpose.msra.mxu0 0
        %1196 = vmatprep.subr.bf16.mxu0 0
        %1197 = vmatpush1.bf16.xpose.msra.mxu0 0
        %1198 = vmatprep.subr.bf16.mxu0 0
        %1199 = vmatpush1.bf16.xpose.msra.mxu0 0
        %1200 = vmatprep.subr.bf16.mxu0 0
        %1201 = vmatpush1.bf16.xpose.msra.mxu0 0
        %1202 = vmatprep.subr.bf16.mxu0 0
        %1203 = vmatpush1.bf16.xpose.msra.mxu0 0
        %1204 = vmatprep.subr.bf16.mxu0 0
        %1205 = vmatpush1.bf16.xpose.msra.mxu0 0
        %1206 = vmatprep.mubr.bf16.mxu0 0
        %1207 = vmatmul.mubr.bf16.gmra.mrb[0].mxu0 %v1169
        %v1208 = vpop.f32.mrb[0].mxu0
        %v1209 = vadd.f32 0.0, %v1208
        %v1210 = vpop.f32.mrb[0].mxu0
        %v1211 = vpop.f32.mrb[0].mxu0
        %v1212 = vpop.f32.mrb[0].mxu0
        %1213 = vdwg.mxu0
        %v1214 = vsel %vm510, %v1209, -inf
        %1215 = vmax.xlane.f32.xlu0 %v1214
        %v1216 = vpop.xlane.xlu0 %1215
        %v1217 = vsub.f32 %v1209, %v1216
        %v1218 = vmul.f32 %v1217, 1.442695
        %v1219 = vpow.pop %v1218
        %v1220 = vsel %vm510, %v1219, 0.0
        %1221 = vadd.xlane.f32.xlu0 %v1220
        %v1222 = vpop.xlane.xlu0 %1221
        %v1223 = vrcp.pop %v1222
        %v1224 = vmul.f32 %v1219, %v1223
        %s1225 = scalar_lea.vmem %s320, 16 [#allocation4]
        %1226 = vst.msk [vmem:[%s1225] sm:$0xff] %vm510, %v1224
        %v1227 = vpack.c.bf16 %v1224, %v1224
        %v1229 = vsel %vm510, %v1227, 0
        %v1232 = vsel %vm573, %v1167, 0
        %1234 = vmatprep.subr.bf16.mxu0 0
        %1235 = vmatpush1.bf16.msra.mxu0 %v1232
        %1236 = vmatprep.subr.bf16.mxu0 0
        %1237 = vmatpush1.bf16.msra.mxu0 0
        %1238 = vmatprep.subr.bf16.mxu0 0
        %1239 = vmatpush1.bf16.msra.mxu0 0
        %1240 = vmatprep.subr.bf16.mxu0 0
        %1241 = vmatpush1.bf16.msra.mxu0 0
        %1242 = vmatprep.subr.bf16.mxu0 0
        %1243 = vmatpush1.bf16.msra.mxu0 0
        %1244 = vmatprep.subr.bf16.mxu0 0
        %1245 = vmatpush1.bf16.msra.mxu0 0
        %1246 = vmatprep.subr.bf16.mxu0 0
        %1247 = vmatpush1.bf16.msra.mxu0 0
        %1248 = vmatprep.subr.bf16.mxu0 0
        %1249 = vmatpush1.bf16.msra.mxu0 0
        %1250 = vmatprep.subr.bf16.mxu0 0
        %1251 = vmatpush1.bf16.msra.mxu0 0
        %1252 = vmatprep.subr.bf16.mxu0 0
        %1253 = vmatpush1.bf16.msra.mxu0 0
        %1254 = vmatprep.subr.bf16.mxu0 0
        %1255 = vmatpush1.bf16.msra.mxu0 0
        %1256 = vmatprep.subr.bf16.mxu0 0
        %1257 = vmatpush1.bf16.msra.mxu0 0
        %1258 = vmatprep.subr.bf16.mxu0 0
        %1259 = vmatpush1.bf16.msra.mxu0 0
        %1260 = vmatprep.subr.bf16.mxu0 0
        %1261 = vmatpush1.bf16.msra.mxu0 0
        %1262 = vmatprep.subr.bf16.mxu0 0
        %1263 = vmatpush1.bf16.msra.mxu0 0
        %1264 = vmatprep.subr.bf16.mxu0 0
        %1265 = vmatpush1.bf16.msra.mxu0 0
        %1266 = vmatprep.mubr.bf16.mxu0 0
        %1267 = vmatmul.mubr.bf16.gmra.mrb[0].mxu0 %v1229
        %v1268 = vpop.f32.mrb[0].mxu0
        %v1269 = vadd.f32 0.0, %v1268
        %v1270 = vpop.f32.mrb[0].mxu0
        %v1271 = vpop.f32.mrb[0].mxu0
        %v1272 = vpop.f32.mrb[0].mxu0
        %1273 = vdwg.mxu0
        %v1274 = vpack.c.bf16 %v1269, %v1269
        %s1275 = scalar_lea.vmem %s5, 8
        %v1276 = vld [vmem:[%s1275] sm:$0xf]
        %v1278 = vsel %vm510, %v1274, 0
        %v1281 = vsel %vm573, %v1276, 0
        %1283 = vmatprep.subr.bf16.mxu0 0
        %1284 = vmatpush1.bf16.msra.mxu0 %v1281
        %1285 = vmatprep.subr.bf16.mxu0 0
        %1286 = vmatpush1.bf16.msra.mxu0 0
        %1287 = vmatprep.subr.bf16.mxu0 0
        %1288 = vmatpush1.bf16.msra.mxu0 0
        %1289 = vmatprep.subr.bf16.mxu0 0
        %1290 = vmatpush1.bf16.msra.mxu0 0
        %1291 = vmatprep.subr.bf16.mxu0 0
        %1292 = vmatpush1.bf16.msra.mxu0 0
        %1293 = vmatprep.subr.bf16.mxu0 0
        %1294 = vmatpush1.bf16.msra.mxu0 0
        %1295 = vmatprep.subr.bf16.mxu0 0
        %1296 = vmatpush1.bf16.msra.mxu0 0
        %1297 = vmatprep.subr.bf16.mxu0 0
        %1298 = vmatpush1.bf16.msra.mxu0 0
        %1299 = vmatprep.subr.bf16.mxu0 0
        %1300 = vmatpush1.bf16.msra.mxu0 0
        %1301 = vmatprep.subr.bf16.mxu0 0
        %1302 = vmatpush1.bf16.msra.mxu0 0
        %1303 = vmatprep.subr.bf16.mxu0 0
        %1304 = vmatpush1.bf16.msra.mxu0 0
        %1305 = vmatprep.subr.bf16.mxu0 0
        %1306 = vmatpush1.bf16.msra.mxu0 0
        %1307 = vmatprep.subr.bf16.mxu0 0
        %1308 = vmatpush1.bf16.msra.mxu0 0
        %1309 = vmatprep.subr.bf16.mxu0 0
        %1310 = vmatpush1.bf16.msra.mxu0 0
        %1311 = vmatprep.subr.bf16.mxu0 0
        %1312 = vmatpush1.bf16.msra.mxu0 0
        %1313 = vmatprep.subr.bf16.mxu0 0
        %1314 = vmatpush1.bf16.msra.mxu0 0
        %1315 = vmatprep.mubr.bf16.mxu0 0
        %1316 = vmatmul.mubr.bf16.gmra.mrb[0].mxu0 %v1278
        %v1317 = vpop.f32.mrb[0].mxu0
        %v1318 = vadd.f32 0.0, %v1317
        %v1319 = vpop.f32.mrb[0].mxu0
        %v1320 = vpop.f32.mrb[0].mxu0
        %v1321 = vpop.f32.mrb[0].mxu0
        %1322 = vdwg.mxu0
        %v1323 = vadd.f32 %v989, %v1318
        %s1324 = scalar_lea.vmem %s2, 48
        %v1325 = vld [vmem:[%s1324] sm:$0xf]
        %v1326 = vld [vmem:[%s1324 + $0x4] sm:$0xf]
        %v1327 = vld [vmem:[%s1324 + $0x8] sm:$0xf]
        %v1328 = vld [vmem:[%s1324 + $0xc] sm:$0xf]
        %v1333 = vunpack.c.l.b16 %v1325
        %v1334 = vunpack.c.l.b16 %v1326
        %v1335 = vunpack.c.l.b16 %v1327
        %v1336 = vunpack.c.l.b16 %v1328
        %v1337 = vpack.c.b16 %v1334, %v1333
        %v1338 = vpack.c.b16 %v1336, %v1335
        %1341 = vmatprep.subr.bf16.mxu0 0
        %1342 = vmatpush1.bf16.msra.mxu0 %v1337
        %1343 = vmatprep.subr.bf16.mxu0 0
        %1344 = vmatpush1.bf16.msra.mxu0 %v1338
        %1345 = vmatprep.subr.bf16.mxu0 0
        %1346 = vmatpush1.bf16.msra.mxu0 0
        %1347 = vmatprep.subr.bf16.mxu0 0
        %1348 = vmatpush1.bf16.msra.mxu0 0
        %1349 = vmatprep.subr.bf16.mxu0 0
        %1350 = vmatpush1.bf16.msra.mxu0 0
        %1351 = vmatprep.subr.bf16.mxu0 0
        %1352 = vmatpush1.bf16.msra.mxu0 0
        %1353 = vmatprep.subr.bf16.mxu0 0
        %1354 = vmatpush1.bf16.msra.mxu0 0
        %1355 = vmatprep.subr.bf16.mxu0 0
        %1356 = vmatpush1.bf16.msra.mxu0 0
        %1357 = vmatprep.subr.bf16.mxu0 0
        %1358 = vmatpush1.bf16.msra.mxu0 0
        %1359 = vmatprep.subr.bf16.mxu0 0
        %1360 = vmatpush1.bf16.msra.mxu0 0
        %1361 = vmatprep.subr.bf16.mxu0 0
        %1362 = vmatpush1.bf16.msra.mxu0 0
        %1363 = vmatprep.subr.bf16.mxu0 0
        %1364 = vmatpush1.bf16.msra.mxu0 0
        %1365 = vmatprep.subr.bf16.mxu0 0
        %1366 = vmatpush1.bf16.msra.mxu0 0
        %1367 = vmatprep.subr.bf16.mxu0 0
        %1368 = vmatpush1.bf16.msra.mxu0 0
        %1369 = vmatprep.subr.bf16.mxu0 0
        %1370 = vmatpush1.bf16.msra.mxu0 0
        %1371 = vmatprep.subr.bf16.mxu0 0
        %1372 = vmatpush1.bf16.msra.mxu0 0
        %1373 = vmatprep.mubr.bf16.mxu0 0
        %1374 = vmatmul.mubr.bf16.gmra.mrb[0].mxu0 %v350
        %v1375 = vpop.f32.mrb[0].mxu0
        %v1376 = vadd.f32 0.0, %v1375
        %v1377 = vpop.f32.mrb[0].mxu0
        %v1378 = vpop.f32.mrb[0].mxu0
        %v1379 = vpop.f32.mrb[0].mxu0
        %1380 = vdwg.mxu0
        %v1381 = vpack.c.bf16 %v1376, %v1376
        %s1382 = scalar_lea.vmem %s3, 48
        %v1383 = vld [vmem:[%s1382] sm:$0xf]
        %v1384 = vld [vmem:[%s1382 + $0x4] sm:$0xf]
        %v1385 = vld [vmem:[%s1382 + $0x8] sm:$0xf]
        %v1386 = vld [vmem:[%s1382 + $0xc] sm:$0xf]
        %v1391 = vunpack.c.l.b16 %v1383
        %v1392 = vunpack.c.l.b16 %v1384
        %v1393 = vunpack.c.l.b16 %v1385
        %v1394 = vunpack.c.l.b16 %v1386
        %v1395 = vpack.c.b16 %v1392, %v1391
        %v1396 = vpack.c.b16 %v1394, %v1393
        %1399 = vmatprep.subr.bf16.mxu0 0
        %1400 = vmatpush1.bf16.msra.mxu0 %v1395
        %1401 = vmatprep.subr.bf16.mxu0 0
        %1402 = vmatpush1.bf16.msra.mxu0 %v1396
        %1403 = vmatprep.subr.bf16.mxu0 0
        %1404 = vmatpush1.bf16.msra.mxu0 0
        %1405 = vmatprep.subr.bf16.mxu0 0
        %1406 = vmatpush1.bf16.msra.mxu0 0
        %1407 = vmatprep.subr.bf16.mxu0 0
        %1408 = vmatpush1.bf16.msra.mxu0 0
        %1409 = vmatprep.subr.bf16.mxu0 0
        %1410 = vmatpush1.bf16.msra.mxu0 0
        %1411 = vmatprep.subr.bf16.mxu0 0
        %1412 = vmatpush1.bf16.msra.mxu0 0
        %1413 = vmatprep.subr.bf16.mxu0 0
        %1414 = vmatpush1.bf16.msra.mxu0 0
        %1415 = vmatprep.subr.bf16.mxu0 0
        %1416 = vmatpush1.bf16.msra.mxu0 0
        %1417 = vmatprep.subr.bf16.mxu0 0
        %1418 = vmatpush1.bf16.msra.mxu0 0
        %1419 = vmatprep.subr.bf16.mxu0 0
        %1420 = vmatpush1.bf16.msra.mxu0 0
        %1421 = vmatprep.subr.bf16.mxu0 0
        %1422 = vmatpush1.bf16.msra.mxu0 0
        %1423 = vmatprep.subr.bf16.mxu0 0
        %1424 = vmatpush1.bf16.msra.mxu0 0
        %1425 = vmatprep.subr.bf16.mxu0 0
        %1426 = vmatpush1.bf16.msra.mxu0 0
        %1427 = vmatprep.subr.bf16.mxu0 0
        %1428 = vmatpush1.bf16.msra.mxu0 0
        %1429 = vmatprep.subr.bf16.mxu0 0
        %1430 = vmatpush1.bf16.msra.mxu0 0
        %1431 = vmatprep.mubr.bf16.mxu0 0
        %1432 = vmatmul.mubr.bf16.gmra.mrb[0].mxu0 %v410
        %v1433 = vpop.f32.mrb[0].mxu0
        %v1434 = vadd.f32 0.0, %v1433
        %v1435 = vpop.f32.mrb[0].mxu0
        %v1436 = vpop.f32.mrb[0].mxu0
        %v1437 = vpop.f32.mrb[0].mxu0
        %1438 = vdwg.mxu0
        %v1439 = vpack.c.bf16 %v1434, %v1434
        %s1440 = scalar_lea.vmem %s4, 48
        %v1441 = vld [vmem:[%s1440] sm:$0xf]
        %v1442 = vld [vmem:[%s1440 + $0x4] sm:$0xf]
        %v1443 = vld [vmem:[%s1440 + $0x8] sm:$0xf]
        %v1444 = vld [vmem:[%s1440 + $0xc] sm:$0xf]
        %v1449 = vunpack.c.l.b16 %v1441
        %v1450 = vunpack.c.l.b16 %v1442
        %v1451 = vunpack.c.l.b16 %v1443
        %v1452 = vunpack.c.l.b16 %v1444
        %v1453 = vpack.c.b16 %v1450, %v1449
        %v1454 = vpack.c.b16 %v1452, %v1451
        %1457 = vmatprep.subr.bf16.mxu0 0
        %1458 = vmatpush1.bf16.msra.mxu0 %v1453
        %1459 = vmatprep.subr.bf16.mxu0 0
        %1460 = vmatpush1.bf16.msra.mxu0 %v1454
        %1461 = vmatprep.subr.bf16.mxu0 0
        %1462 = vmatpush1.bf16.msra.mxu0 0
        %1463 = vmatprep.subr.bf16.mxu0 0
        %1464 = vmatpush1.bf16.msra.mxu0 0
        %1465 = vmatprep.subr.bf16.mxu0 0
        %1466 = vmatpush1.bf16.msra.mxu0 0
        %1467 = vmatprep.subr.bf16.mxu0 0
        %1468 = vmatpush1.bf16.msra.mxu0 0
        %1469 = vmatprep.subr.bf16.mxu0 0
        %1470 = vmatpush1.bf16.msra.mxu0 0
        %1471 = vmatprep.subr.bf16.mxu0 0
        %1472 = vmatpush1.bf16.msra.mxu0 0
        %1473 = vmatprep.subr.bf16.mxu0 0
        %1474 = vmatpush1.bf16.msra.mxu0 0
        %1475 = vmatprep.subr.bf16.mxu0 0
        %1476 = vmatpush1.bf16.msra.mxu0 0
        %1477 = vmatprep.subr.bf16.mxu0 0
        %1478 = vmatpush1.bf16.msra.mxu0 0
        %1479 = vmatprep.subr.bf16.mxu0 0
        %1480 = vmatpush1.bf16.msra.mxu0 0
        %1481 = vmatprep.subr.bf16.mxu0 0
        %1482 = vmatpush1.bf16.msra.mxu0 0
        %1483 = vmatprep.subr.bf16.mxu0 0
        %1484 = vmatpush1.bf16.msra.mxu0 0
        %1485 = vmatprep.subr.bf16.mxu0 0
        %1486 = vmatpush1.bf16.msra.mxu0 0
        %1487 = vmatprep.subr.bf16.mxu0 0
        %1488 = vmatpush1.bf16.msra.mxu0 0
        %1489 = vmatprep.mubr.bf16.mxu0 0
        %1490 = vmatmul.mubr.bf16.gmra.mrb[0].mxu0 %v410
        %v1491 = vpop.f32.mrb[0].mxu0
        %v1492 = vadd.f32 0.0, %v1491
        %v1493 = vpop.f32.mrb[0].mxu0
        %v1494 = vpop.f32.mrb[0].mxu0
        %v1495 = vpop.f32.mrb[0].mxu0
        %1496 = vdwg.mxu0
        %v1497 = vpack.c.bf16 %v1492, %v1492
        %v1499 = vsel %vm510, %v1381, 0
        %v1502 = vsel %vm510, %v1439, 0
        %1504 = vmatprep.subr.bf16.mxu0 0
        %1505 = vmatpush1.bf16.xpose.msra.mxu0 %v1502
        %1506 = vmatprep.subr.bf16.mxu0 0
        %1507 = vmatpush1.bf16.xpose.msra.mxu0 0
        %1508 = vmatprep.subr.bf16.mxu0 0
        %1509 = vmatpush1.bf16.xpose.msra.mxu0 0
        %1510 = vmatprep.subr.bf16.mxu0 0
        %1511 = vmatpush1.bf16.xpose.msra.mxu0 0
        %1512 = vmatprep.subr.bf16.mxu0 0
        %1513 = vmatpush1.bf16.xpose.msra.mxu0 0
        %1514 = vmatprep.subr.bf16.mxu0 0
        %1515 = vmatpush1.bf16.xpose.msra.mxu0 0
        %1516 = vmatprep.subr.bf16.mxu0 0
        %1517 = vmatpush1.bf16.xpose.msra.mxu0 0
        %1518 = vmatprep.subr.bf16.mxu0 0
        %1519 = vmatpush1.bf16.xpose.msra.mxu0 0
        %1520 = vmatprep.subr.bf16.mxu0 0
        %1521 = vmatpush1.bf16.xpose.msra.mxu0 0
        %1522 = vmatprep.subr.bf16.mxu0 0
        %1523 = vmatpush1.bf16.xpose.msra.mxu0 0
        %1524 = vmatprep.subr.bf16.mxu0 0
        %1525 = vmatpush1.bf16.xpose.msra.mxu0 0
        %1526 = vmatprep.subr.bf16.mxu0 0
        %1527 = vmatpush1.bf16.xpose.msra.mxu0 0
        %1528 = vmatprep.subr.bf16.mxu0 0
        %1529 = vmatpush1.bf16.xpose.msra.mxu0 0
        %1530 = vmatprep.subr.bf16.mxu0 0
        %1531 = vmatpush1.bf16.xpose.msra.mxu0 0
        %1532 = vmatprep.subr.bf16.mxu0 0
        %1533 = vmatpush1.bf16.xpose.msra.mxu0 0
        %1534 = vmatprep.subr.bf16.mxu0 0
        %1535 = vmatpush1.bf16.xpose.msra.mxu0 0
        %1536 = vmatprep.mubr.bf16.mxu0 0
        %1537 = vmatmul.mubr.bf16.gmra.mrb[0].mxu0 %v1499
        %v1538 = vpop.f32.mrb[0].mxu0
        %v1539 = vadd.f32 0.0, %v1538
        %v1540 = vpop.f32.mrb[0].mxu0
        %v1541 = vpop.f32.mrb[0].mxu0
        %v1542 = vpop.f32.mrb[0].mxu0
        %1543 = vdwg.mxu0
        %v1544 = vsel %vm510, %v1539, -inf
        %1545 = vmax.xlane.f32.xlu0 %v1544
        %v1546 = vpop.xlane.xlu0 %1545
        %v1547 = vsub.f32 %v1539, %v1546
        %v1548 = vmul.f32 %v1547, 1.442695
        %v1549 = vpow.pop %v1548
        %v1550 = vsel %vm510, %v1549, 0.0
        %1551 = vadd.xlane.f32.xlu0 %v1550
        %v1552 = vpop.xlane.xlu0 %1551
        %v1553 = vrcp.pop %v1552
        %v1554 = vmul.f32 %v1549, %v1553
        %s1555 = scalar_lea.vmem %s320, 24 [#allocation4]
        %1556 = vst.msk [vmem:[%s1555] sm:$0xff] %vm510, %v1554
        %v1557 = vpack.c.bf16 %v1554, %v1554
        %v1559 = vsel %vm510, %v1557, 0
        %v1562 = vsel %vm573, %v1497, 0
        %1564 = vmatprep.subr.bf16.mxu0 0
        %1565 = vmatpush1.bf16.msra.mxu0 %v1562
        %1566 = vmatprep.subr.bf16.mxu0 0
        %1567 = vmatpush1.bf16.msra.mxu0 0
        %1568 = vmatprep.subr.bf16.mxu0 0
        %1569 = vmatpush1.bf16.msra.mxu0 0
        %1570 = vmatprep.subr.bf16.mxu0 0
        %1571 = vmatpush1.bf16.msra.mxu0 0
        %1572 = vmatprep.subr.bf16.mxu0 0
        %1573 = vmatpush1.bf16.msra.mxu0 0
        %1574 = vmatprep.subr.bf16.mxu0 0
        %1575 = vmatpush1.bf16.msra.mxu0 0
        %1576 = vmatprep.subr.bf16.mxu0 0
        %1577 = vmatpush1.bf16.msra.mxu0 0
        %1578 = vmatprep.subr.bf16.mxu0 0
        %1579 = vmatpush1.bf16.msra.mxu0 0
        %1580 = vmatprep.subr.bf16.mxu0 0
        %1581 = vmatpush1.bf16.msra.mxu0 0
        %1582 = vmatprep.subr.bf16.mxu0 0
        %1583 = vmatpush1.bf16.msra.mxu0 0
        %1584 = vmatprep.subr.bf16.mxu0 0
        %1585 = vmatpush1.bf16.msra.mxu0 0
        %1586 = vmatprep.subr.bf16.mxu0 0
        %1587 = vmatpush1.bf16.msra.mxu0 0
        %1588 = vmatprep.subr.bf16.mxu0 0
        %1589 = vmatpush1.bf16.msra.mxu0 0
        %1590 = vmatprep.subr.bf16.mxu0 0
        %1591 = vmatpush1.bf16.msra.mxu0 0
        %1592 = vmatprep.subr.bf16.mxu0 0
        %1593 = vmatpush1.bf16.msra.mxu0 0
        %1594 = vmatprep.subr.bf16.mxu0 0
        %1595 = vmatpush1.bf16.msra.mxu0 0
        %1596 = vmatprep.mubr.bf16.mxu0 0
        %1597 = vmatmul.mubr.bf16.gmra.mrb[0].mxu0 %v1559
        %v1598 = vpop.f32.mrb[0].mxu0
        %v1599 = vadd.f32 0.0, %v1598
        %v1600 = vpop.f32.mrb[0].mxu0
        %v1601 = vpop.f32.mrb[0].mxu0
        %v1602 = vpop.f32.mrb[0].mxu0
        %1603 = vdwg.mxu0
        %v1604 = vpack.c.bf16 %v1599, %v1599
        %s1605 = scalar_lea.vmem %s5, 12
        %v1606 = vld [vmem:[%s1605] sm:$0xf]
        %v1608 = vsel %vm510, %v1604, 0
        %v1611 = vsel %vm573, %v1606, 0
        %1613 = vmatprep.subr.bf16.mxu0 0
        %1614 = vmatpush1.bf16.msra.mxu0 %v1611
        %1615 = vmatprep.subr.bf16.mxu0 0
        %1616 = vmatpush1.bf16.msra.mxu0 0
        %1617 = vmatprep.subr.bf16.mxu0 0
        %1618 = vmatpush1.bf16.msra.mxu0 0
        %1619 = vmatprep.subr.bf16.mxu0 0
        %1620 = vmatpush1.bf16.msra.mxu0 0
        %1621 = vmatprep.subr.bf16.mxu0 0
        %1622 = vmatpush1.bf16.msra.mxu0 0
        %1623 = vmatprep.subr.bf16.mxu0 0
        %1624 = vmatpush1.bf16.msra.mxu0 0
        %1625 = vmatprep.subr.bf16.mxu0 0
        %1626 = vmatpush1.bf16.msra.mxu0 0
        %1627 = vmatprep.subr.bf16.mxu0 0
        %1628 = vmatpush1.bf16.msra.mxu0 0
        %1629 = vmatprep.subr.bf16.mxu0 0
        %1630 = vmatpush1.bf16.msra.mxu0 0
        %1631 = vmatprep.subr.bf16.mxu0 0
        %1632 = vmatpush1.bf16.msra.mxu0 0
        %1633 = vmatprep.subr.bf16.mxu0 0
        %1634 = vmatpush1.bf16.msra.mxu0 0
        %1635 = vmatprep.subr.bf16.mxu0 0
        %1636 = vmatpush1.bf16.msra.mxu0 0
        %1637 = vmatprep.subr.bf16.mxu0 0
        %1638 = vmatpush1.bf16.msra.mxu0 0
        %1639 = vmatprep.subr.bf16.mxu0 0
        %1640 = vmatpush1.bf16.msra.mxu0 0
        %1641 = vmatprep.subr.bf16.mxu0 0
        %1642 = vmatpush1.bf16.msra.mxu0 0
        %1643 = vmatprep.subr.bf16.mxu0 0
        %1644 = vmatpush1.bf16.msra.mxu0 0
        %1645 = vmatprep.mubr.bf16.mxu0 0
        %1646 = vmatmul.mubr.bf16.gmra.mrb[0].mxu0 %v1608
        %v1647 = vpop.f32.mrb[0].mxu0
        %v1648 = vadd.f32 0.0, %v1647
        %v1649 = vpop.f32.mrb[0].mxu0
        %v1650 = vpop.f32.mrb[0].mxu0
        %v1651 = vpop.f32.mrb[0].mxu0
        %1652 = vdwg.mxu0
        %v1653 = vadd.f32 %v1323, %v1648
        %v1654 = vld [vmem:[%s6] sm:$0x1]
        %v1656 = vlaneseq
        %v1657 = vshrl.u32 %v1656, 7
        %v1658 = vsub.s32 0, %v1657
        %v1659 = vrot.slane %v1654, %v1658
        %v1661 = vadd.f32 %v1653, %v1659
        %1662 = vst.msk [vmem:[%s313] sm:$0xff] %vm348, %v1661
        %s1663 = sand.u32 %s191, 1
        %s1664 = scalar_lea.sflag [#allocation3], %s1663
        %s1665 = sand.u32 %s191, 1
        %s1666 = smul.addr %s1665, 8
        %s1667 = scalar_lea.vmem [#allocation2], %s1666
        %s1668 = sand.u32 %s217, 1
        %s1669 = scalar_lea.sflag [#allocation5], %s1668
        %s1670 = sand.u32 %s217, 1
        %s1671 = smul.addr %s1670, 32
        %s1672 = scalar_lea.vmem [#allocation4], %s1671
        // Predicated region
        $region49: #{tpu_custom_call.1} parent=47 // pred_check
          %p1673 = pneg %p201
        $region50: #{tpu_custom_call.1} parent=47 // pred_check_branch
          %1675 = sbr.rel (%p1673) target = $region52
        $region51: #{tpu_custom_call.1} parent=47 // pred_region
          %s1677 = ssub.s32 128, 128
          %1678 = vsyncadd %s1664, %s1677
          %s1679 = smul.addr %s26, 128
          %s1680 = scalar_lea.hbm %s7, %s1679
          %s1682 = sshll.u32 %s1667, 4
          %s1683 = int_to_ptr.vmem [resolvable:$true] %s1682
          %1685 = dma.vmem_to_hbm [thread:$0]  %s1683, 128, %s1680, %s1664
        $region52: #{tpu_custom_call.1} parent=47 // pred_fallthru
          _
        // Predicated region
        $region53: #{tpu_custom_call.1} parent=47 // pred_check
          %p1686 = pneg %p227
        $region54: #{tpu_custom_call.1} parent=47 // pred_check_branch
          %1688 = sbr.rel (%p1686) target = $region56
        $region55: #{tpu_custom_call.1} parent=47 // pred_region
          %s1690 = ssub.s32 512, 512
          %1691 = vsyncadd %s1669, %s1690
          %s1692 = smul.addr %s26, 4
          %s1693 = smul.addr %s1692, 128
          %s1694 = scalar_lea.hbm %s8, %s1693
          %s1695 = sshll.u32 %s1672, 4
          %s1696 = int_to_ptr.vmem [resolvable:$true] %s1695
          %1701 = dma.vmem_to_hbm [thread:$0]  %s1696, 512, %s1694, %s1669, 128, 128, 8
        $region56: #{tpu_custom_call.1} parent=47 // pred_fallthru
          _
      $region48: #{tpu_custom_call.1} parent=5 // pred_fallthru
        _
      %p1702 = scmp.le.s32.totalorder 2, %s21
      // Predicated region
      $region57: #{tpu_custom_call.1} parent=5 // pred_check
        %p1703 = pneg %p1702
      $region58: #{tpu_custom_call.1} parent=5 // pred_check_branch
        %1705 = sbr.rel (%p1703) target = $region60
      $region59: #{tpu_custom_call.1} parent=5 // pred_region
        %s1706 = ssub.s32 %s21, 2
        // Predicated region
        $region61: #{tpu_custom_call.1} parent=59 // pred_check
          %p1707 = pneg %p207
        $region62: #{tpu_custom_call.1} parent=59 // pred_check_branch
          %1709 = sbr.rel (%p1707) target = $region64
        $region63: #{tpu_custom_call.1} parent=59 // pred_region
          %s1710 = sand.u32 %s192, 1
          %s1711 = scalar_lea.sflag [#allocation3], %s1710
          %s1712 = sand.u32 %s192, 1
          %s1713 = smul.addr %s1712, 8
          %s1714 = scalar_lea.vmem [#allocation2], %s1713
          %1715 = dma.done %s1711, 128
        $region64: #{tpu_custom_call.1} parent=59 // pred_fallthru
          _
        // Predicated region
        $region65: #{tpu_custom_call.1} parent=59 // pred_check
          %p1716 = pneg %p233
        $region66: #{tpu_custom_call.1} parent=59 // pred_check_branch
          %1718 = sbr.rel (%p1716) target = $region68
        $region67: #{tpu_custom_call.1} parent=59 // pred_region
          %s1719 = sand.u32 %s218, 1
          %s1720 = scalar_lea.sflag [#allocation5], %s1719
          %s1721 = sand.u32 %s218, 1
          %s1722 = smul.addr %s1721, 32
          %s1723 = scalar_lea.vmem [#allocation4], %s1722
          %1724 = dma.done %s1720, 512
        $region68: #{tpu_custom_call.1} parent=59 // pred_fallthru
          _
      $region60: #{tpu_custom_call.1} parent=5 // pred_fallthru
        _
    $region6: #{tpu_custom_call.1} parent=1 // loop_footer
      %s25 = sadd.s32 1, %s21
    $region7: #{tpu_custom_call.1} parent=1 // loop_footer_branch
      %20 = sbr.rel target = $region3
    $region8: #{tpu_custom_call.1} parent=1 // loop_exit
      _
    %1725 = vsyncpa [#allocation3], 1
    %s1726 = scalar_lea.sflag [#allocation3], 1
    %1727 = vsyncpa %s1726, 1
    %1728 = vsyncpa [#allocation5], 1
    %s1729 = scalar_lea.sflag [#allocation5], 1
    %1730 = vsyncpa %s1729, 1

</llo_original>
